<compile_context>
chip_gen: v6e
topology: v6e:2x2x1
jax: 0.10.0
libtpu: 0.0.40
codegen_flags: <defaults>
</compile_context>

<pallas_src>
import functools

import jax
import jax.numpy as jnp
from jax.experimental import pallas as pl
from jax.experimental.pallas import tpu as pltpu

HIDDEN = 768
MID = 512
LANE = 128
_ROW_GRAN = 16      # bf16 sublane packing granularity
_TILE_B_CAP = 512   # ~5.5 MiB pipelined VMEM: fits v5e/v6e/v7x defaults


def _round_up(x, m):
    return ((x + m - 1) // m) * m


def _choose_tile_b(batch):
    """Adaptive batch tile: big enough to amortize per-step overhead, small
    enough that small batches do no wasted work, and (when the batch allows)
    producing >= 2 grid steps so v7x megacore shards the grid."""
    t = min(_TILE_B_CAP, _round_up(batch, _ROW_GRAN))
    if batch >= 2 * _ROW_GRAN and pl.cdiv(batch, t) < 2:
        t = _round_up(pl.cdiv(batch, 2), _ROW_GRAN)
    return t


def classifier_kernel(x_ref, w1_ref, b1_ref, w2_ref, b2_ref, out_ref):
    # x_ref:  [TB, 768] (any float)   w1_ref: [768, 512] bf16   b1_ref: [1, 512] f32
    # w2_ref: [512, Cp] bf16          b2_ref: [1, Cp]    f32    out_ref: [TB, Cp] f32
    x = x_ref[...].astype(jnp.bfloat16)  # in-kernel cast: no extra HBM pass

    # Linear(768, 512) + bias + ReLU  (bf16 MXU, f32 accumulation).
    h = jnp.dot(x, w1_ref[...], preferred_element_type=jnp.float32) + b1_ref[...]
    h = jnp.maximum(h, 0.0)

    # Dropout(0.1): eval-mode identity.
    # TODO(synk): training-mode dropout (pltpu.prng_random_bits mask) not emitted.

    # Linear(512, Cp) + bias  (bf16 MXU, f32 accumulation).
    logits = (
        jnp.dot(h.astype(jnp.bfloat16), w2_ref[...],
                preferred_element_type=jnp.float32)
        + b2_ref[...]
    )
    # Padded class columns contribute 0 from the matmul (w2 cols are 0) and
    # carry bias -1e30, so they vanish from the log-softmax without masking.

    # LogSoftmax(dim=1).
    m = jnp.max(logits, axis=1, keepdims=True)
    z = logits - m
    lse = jnp.log(jnp.sum(jnp.exp(z), axis=1, keepdims=True))
    out_ref[...] = (z - lse).astype(out_ref.dtype)


def prepare_classifier_params(w1, b1, w2, b2):
    """One-time parameter prep (do at load time, NOT per call):
    bf16 cast, class-dim padding to 128 lanes, mask folded into b2 padding.
    w1: [768,512], b1: [512], w2: [512,num_out], b2: [num_out]."""
    num_out = w2.shape[1]
    c_pad = _round_up(max(num_out, LANE), LANE)
    w1_b = jnp.asarray(w1, jnp.bfloat16)
    b1_f = jnp.asarray(b1, jnp.float32).reshape(1, MID)
    w2_b = jnp.pad(jnp.asarray(w2, jnp.bfloat16), ((0, 0), (0, c_pad - num_out)))
    b2_f = jnp.pad(
        jnp.asarray(b2, jnp.float32).reshape(1, num_out),
        ((0, 0), (0, c_pad - num_out)),
        constant_values=-1e30,
    )
    return {"w1": w1_b, "b1": b1_f, "w2": w2_b, "b2": b2_f, "num_out": num_out}


@functools.partial(jax.jit, static_argnames=("num_out",))
def _classifier_head_impl(hidden_states, w1, b1, w2, b2, *, num_out):
    B, H = hidden_states.shape
    assert H == HIDDEN
    c_pad = w2.shape[1]
    tile_b = _choose_tile_b(B)
    grid = (pl.cdiv(B, tile_b),)  # partial last block handled by Pallas masking

    grid_spec = pltpu.PrefetchScalarGridSpec(
        num_scalar_prefetch=0,
        grid=grid,
        in_specs=[
            pl.BlockSpec((tile_b, HIDDEN), lambda i: (i, 0)),   # x tile
            pl.BlockSpec((HIDDEN, MID), lambda i: (0, 0)),      # w1 (resident)
            pl.BlockSpec((1, MID), lambda i: (0, 0)),           # b1 (resident)
            pl.BlockSpec((MID, c_pad), lambda i: (0, 0)),       # w2 (resident)
            pl.BlockSpec((1, c_pad), lambda i: (0, 0)),         # b2 (resident)
        ],
        out_specs=pl.BlockSpec((tile_b, c_pad), lambda i: (i, 0)),
    )

    out = pl.pallas_call(
        classifier_kernel,
        out_shape=jax.ShapeDtypeStruct((B, c_pad), jnp.float32),
        grid_spec=grid_spec,
        compiler_params=pltpu.CompilerParams(
            dimension_semantics=("parallel",),  # megacore sharding on v7x
        ),
    )(hidden_states, w1, b1, w2, b2)

    return out[:, :num_out]


def classifier_head(hidden_states, params):
    """Fused classifier head.  hidden_states: [B, 768] (any float dtype).
    Returns log-probabilities [B, num_out] in float32."""
    return _classifier_head_impl(
        hidden_states, params["w1"], params["b1"], params["w2"], params["b2"],
        num_out=params["num_out"],
    )


def cross_entropy_on_logprobs(log_probs, labels):
    # Matches the PyTorch module: nn.CrossEntropyLoss applied to the
    # LogSoftmax output (i.e. an intentional second log-softmax in the loss).
    lp2 = log_probs - jax.scipy.special.logsumexp(log_probs, axis=1, keepdims=True)
    nll = -jnp.take_along_axis(lp2, labels[:, None], axis=1)[:, 0]
    return jnp.mean(nll)


if __name__ == "__main__":
    key = jax.random.PRNGKey(0)
    B = 8          # batch (small demo; tile_b adapts, no 128-row padding)
    NUM_OUT = 8    # classifier classes (padded to 128 lanes internally)

    k_h, k_w1, k_b1, k_w2, k_b2, k_lbl = jax.random.split(key, 6)

    # Stand-in for self.model(input_ids, attention_mask).last_hidden_state[:, 0, :]
    # TODO(synk): frozen pretrained transformer backbone not reproducible without weights.
    hidden_states = jax.random.normal(k_h, (B, HIDDEN), dtype=jnp.float32)

    # Deterministic classifier parameters (nn.Linear-style scale), stored [in, out].
    w1 = jax.random.normal(k_w1, (HIDDEN, MID), dtype=jnp.float32) * (1.0 / HIDDEN**0.5)
    b1 = jax.random.normal(k_b1, (MID,), dtype=jnp.float32) * 0.01
    w2 = jax.random.normal(k_w2, (MID, NUM_OUT), dtype=jnp.float32) * (1.0 / MID**0.5)
    b2 = jax.random.normal(k_b2, (NUM_OUT,), dtype=jnp.float32) * 0.01

    # One-time parameter prep (cast/pad), then the fused Pallas head.
    params = prepare_classifier_params(w1, b1, w2, b2)
    log_probs = classifier_head(hidden_states, params)
    log_probs = jax.block_until_ready(log_probs)
    assert log_probs.shape == (B, NUM_OUT)

    # Reference check in plain JAX, mirroring the bf16-in / f32-accumulate path.
    x_bf = hidden_states.astype(jnp.bfloat16)
    ref_h = jnp.maximum(
        jnp.dot(x_bf, w1.astype(jnp.bfloat16), preferred_element_type=jnp.float32)
        + b1[None, :],
        0.0,
    )
    ref_logits = (
        jnp.dot(ref_h.astype(jnp.bfloat16), w2.astype(jnp.bfloat16),
                preferred_element_type=jnp.float32)
        + b2[None, :]
    )
    ref_logp = ref_logits - jax.scipy.special.logsumexp(ref_logits, axis=1, keepdims=True)
    assert jnp.allclose(log_probs, ref_logp, atol=5e-2, rtol=5e-2), (
        float(jnp.max(jnp.abs(log_probs - ref_logp)))
    )

    # Optional loss branch (label provided), plain-JAX glue like the PyTorch wrapper.
    labels = jax.random.randint(k_lbl, (B,), 0, NUM_OUT)
    loss = jax.block_until_ready(cross_entropy_on_logprobs(log_probs, labels))
    assert jnp.isfinite(loss)

    print("KERNEL_OK")
</pallas_src>

<mosaic_0001>
module attributes {stable_mosaic.version = 11 : i64} {
  func.func @classifier_kernel(%arg0: i32, %arg1: memref<16x768xf32, #tpu.memory_space<vmem>>, %arg2: memref<768x512xbf16, #tpu.memory_space<vmem>>, %arg3: memref<1x512xf32, #tpu.memory_space<vmem>>, %arg4: memref<512x128xbf16, #tpu.memory_space<vmem>>, %arg5: memref<1x128xf32, #tpu.memory_space<vmem>>, %arg6: memref<16x128xf32, #tpu.memory_space<vmem>>) attributes {dimension_semantics = [#tpu.dimension_semantics<parallel>], iteration_bounds = array<i64: 1>, scalar_prefetch = 0 : i64, scratch_operands = 0 : i64, tpu.core_type = #tpu.core_type<tc>, window_params = [{transform_indices = @transform_0, window_bounds = array<i64: 16, 768>}, {pipeline_mode = #tpu.pipeline_mode<synchronous>, transform_indices = @transform_1, window_bounds = array<i64: 768, 512>}, {pipeline_mode = #tpu.pipeline_mode<synchronous>, transform_indices = @transform_2, window_bounds = array<i64: 1, 512>}, {pipeline_mode = #tpu.pipeline_mode<synchronous>, transform_indices = @transform_3, window_bounds = array<i64: 512, 128>}, {pipeline_mode = #tpu.pipeline_mode<synchronous>, transform_indices = @transform_4, window_bounds = array<i64: 1, 128>}, {transform_indices = @transform_5, window_bounds = array<i64: 16, 128>}]} {
    %c0 = arith.constant 0 : index
    %c0_0 = arith.constant 0 : index
    %0 = vector.load %arg1[%c0, %c0_0] : memref<16x768xf32, #tpu.memory_space<vmem>>, vector<16x768xf32>
    %1 = arith.truncf %0 : vector<16x768xf32> to vector<16x768xbf16>
    %c0_1 = arith.constant 0 : index
    %c0_2 = arith.constant 0 : index
    %2 = vector.load %arg2[%c0_1, %c0_2] : memref<768x512xbf16, #tpu.memory_space<vmem>>, vector<768x512xbf16>
    %cst = arith.constant dense<0.000000e+00> : vector<16x512xf32>
    %3 = tpu.matmul %1, %2, %cst {dimension_numbers = #tpu.dot_dimension_numbers<[1], [0], [0], [1], [0, 0, 1, 1], [], []>} : vector<16x768xbf16>, vector<768x512xbf16>, vector<16x512xf32> -> vector<16x512xf32>
    %c0_3 = arith.constant 0 : index
    %c0_4 = arith.constant 0 : index
    %4 = vector.load %arg3[%c0_3, %c0_4] : memref<1x512xf32, #tpu.memory_space<vmem>>, vector<1x512xf32>
    %5 = vector.broadcast %4 : vector<1x512xf32> to vector<16x512xf32>
    %6 = arith.addf %3, %5 : vector<16x512xf32>
    %cst_5 = arith.constant 0.000000e+00 : f32
    %7 = vector.broadcast %cst_5 : f32 to vector<16x512xf32>
    %8 = arith.maximumf %6, %7 : vector<16x512xf32>
    %9 = arith.truncf %8 : vector<16x512xf32> to vector<16x512xbf16>
    %c0_6 = arith.constant 0 : index
    %c0_7 = arith.constant 0 : index
    %10 = vector.load %arg4[%c0_6, %c0_7] : memref<512x128xbf16, #tpu.memory_space<vmem>>, vector<512x128xbf16>
    %cst_8 = arith.constant dense<0.000000e+00> : vector<16x128xf32>
    %11 = tpu.matmul %9, %10, %cst_8 {dimension_numbers = #tpu.dot_dimension_numbers<[1], [0], [0], [1], [0, 0, 1, 1], [], []>} : vector<16x512xbf16>, vector<512x128xbf16>, vector<16x128xf32> -> vector<16x128xf32>
    %c0_9 = arith.constant 0 : index
    %c0_10 = arith.constant 0 : index
    %12 = vector.load %arg5[%c0_9, %c0_10] : memref<1x128xf32, #tpu.memory_space<vmem>>, vector<1x128xf32>
    %13 = vector.broadcast %12 : vector<1x128xf32> to vector<16x128xf32>
    %14 = arith.addf %11, %13 : vector<16x128xf32>
    %cst_11 = arith.constant dense<0xFF800000> : vector<16xf32>
    %15 = vector.multi_reduction <maximumf>, %14, %cst_11 [1] : vector<16x128xf32> to vector<16xf32>
    %16 = vector.shape_cast %15 : vector<16xf32> to vector<16x1xf32>
    %17 = vector.broadcast %16 : vector<16x1xf32> to vector<16x128xf32>
    %18 = arith.subf %14, %17 : vector<16x128xf32>
    %19 = math.exp %18 : vector<16x128xf32>
    %cst_12 = arith.constant dense<0.000000e+00> : vector<16xf32>
    %20 = vector.multi_reduction <add>, %19, %cst_12 [1] : vector<16x128xf32> to vector<16xf32>
    %21 = vector.shape_cast %20 : vector<16xf32> to vector<16x1xf32>
    %22 = math.log %21 : vector<16x1xf32>
    %23 = vector.broadcast %22 : vector<16x1xf32> to vector<16x128xf32>
    %24 = arith.subf %18, %23 : vector<16x128xf32>
    %c0_13 = arith.constant 0 : index
    %c0_14 = arith.constant 0 : index
    %25 = vector.load %arg6[%c0_13, %c0_14] : memref<16x128xf32, #tpu.memory_space<vmem>>, vector<16x128xf32>
    tpu.vector_store %arg6[%c0_13, %c0_14], %24 {strides = array<i32>} : memref<16x128xf32, #tpu.memory_space<vmem>>, vector<16x128xf32>,
    return
  }
  func.func @transform_0(%arg0: i32) -> (i32, i32) {
    %c0_i32 = arith.constant 0 : i32
    %c0_i32_0 = arith.constant 0 : i32
    return %arg0, %c0_i32 : i32, i32
  }
  func.func @transform_1(%arg0: i32) -> (i32, i32) {
    %c0_i32 = arith.constant 0 : i32
    %c0_i32_0 = arith.constant 0 : i32
    %c0_i32_1 = arith.constant 0 : i32
    return %c0_i32, %c0_i32_0 : i32, i32
  }
  func.func @transform_2(%arg0: i32) -> (i32, i32) {
    %c0_i32 = arith.constant 0 : i32
    %c0_i32_0 = arith.constant 0 : i32
    %c0_i32_1 = arith.constant 0 : i32
    return %c0_i32, %c0_i32_0 : i32, i32
  }
  func.func @transform_3(%arg0: i32) -> (i32, i32) {
    %c0_i32 = arith.constant 0 : i32
    %c0_i32_0 = arith.constant 0 : i32
    %c0_i32_1 = arith.constant 0 : i32
    return %c0_i32, %c0_i32_0 : i32, i32
  }
  func.func @transform_4(%arg0: i32) -> (i32, i32) {
    %c0_i32 = arith.constant 0 : i32
    %c0_i32_0 = arith.constant 0 : i32
    %c0_i32_1 = arith.constant 0 : i32
    return %c0_i32, %c0_i32_0 : i32, i32
  }
  func.func @transform_5(%arg0: i32) -> (i32, i32) {
    %c0_i32 = arith.constant 0 : i32
    %c0_i32_0 = arith.constant 0 : i32
    return %arg0, %c0_i32 : i32, i32
  }
}

</mosaic_0001>

<llo_original>
// kernel: _classifier_head_impl.1
$region0: #{_classifier_head_impl.1}
  #allocation0 [shape = 'u32[]', space=smem, size = 0x4, offset = 0x4, fixed_abs, tag = 'smem constant byte address 0x4 - core index']
  #allocation1 [shape = 'u32[144,128]{1,0:T(1,128)}', space=vmem, size = 0x12000, scoped, tag = 'internal scratch']
  %s0 = inlined_call_operand.hbm [shape: f32[8,768], index: 0, kind: input, shape index: {}]
  %s1 = inlined_call_operand.hbm [shape: bf16[768,512], index: 1, kind: input, shape index: {}]
  %s2 = inlined_call_operand.hbm [shape: f32[1,512], index: 2, kind: input, shape index: {}]
  %s3 = inlined_call_operand.hbm [shape: bf16[512,128], index: 3, kind: input, shape index: {}]
  %s4 = inlined_call_operand.vmem [shape: f32[1,128], index: 4, kind: input, shape index: {}]
  %s5 = inlined_call_operand.hbm [shape: f32[8,128], index: 5, kind: output, shape index: {}]
  %s6 = sld [smem:[#allocation0]]
  $region46: #{_classifier_head_impl.1} parent=0
    _
  %s8 = ssub.s32 1, %s6
  %s9 = scalar_select 0, %s8, %s6
  $region1: #{_classifier_head_impl.1} parent=0
    #allocation2 [shape = 'u8[49152]{0}', space=vmem, size = 0xc000, scoped, tag = 'input window, operand 0, single buffered']
    #allocation3 [shape = 's32[1]{0}', space=sflag, size = 0x4, scoped, tag = 'scoped memory for _classifier_head_impl.1']
    #allocation4 [shape = 's32[1]{0}', space=sflag, size = 0x4, scoped, tag = 'scoped memory for _classifier_head_impl.1']
    #allocation5 [shape = 'u8[786432]{0}', space=vmem, size = 0xc0000, scoped, tag = 'input window, operand 1, single buffered']
    #allocation6 [shape = 's32[1]{0}', space=sflag, size = 0x4, scoped, tag = 'scoped memory for _classifier_head_impl.1']
    #allocation7 [shape = 'u8[2048]{0}', space=vmem, size = 0x800, scoped, tag = 'input window, operand 2, single buffered']
    #allocation8 [shape = 'u8[131072]{0}', space=vmem, size = 0x20000, scoped, tag = 'input window, operand 3, single buffered']
    #allocation9 [shape = 's32[1]{0}', space=sflag, size = 0x4, scoped, tag = 'scoped memory for _classifier_head_impl.1']
    #allocation10 [shape = 'u8[8192]{0}', space=vmem, size = 0x2000, scoped, tag = 'output window, operand 0, single buffered']
    %10 = vsyncpa [#allocation3], 0
    %11 = vsyncpa [#allocation6], 0
    %12 = vsyncpa [#allocation9], 0
    %13 = vsyncpa [#allocation4], 0
    // Predicated region
    $region2: #{_classifier_head_impl.1} parent=1 // pred_check
      _
    $region3: #{_classifier_head_impl.1} parent=1 // pred_check_branch
      %15 = sbr.rel (0) target = $region5
    $region4: #{_classifier_head_impl.1} parent=1 // pred_region
      %s17 = ssub.s32 1536, 768
      %18 = vsyncadd [#allocation3], %s17
      %s19 = sshll.u32 [#allocation2], 4
      %s20 = int_to_ptr.vmem [resolvable:$true] %s19
      %25 = dma.hbm_to_vmem [thread:$0]  %s0, 768, %s20, [#allocation3], 768, 768, 48
    $region5: #{_classifier_head_impl.1} parent=1 // pred_fallthru
      _
    // Predicated region
    $region6: #{_classifier_head_impl.1} parent=1 // pred_check
      _
    $region7: #{_classifier_head_impl.1} parent=1 // pred_check_branch
      %27 = sbr.rel (0) target = $region9
    $region8: #{_classifier_head_impl.1} parent=1 // pred_region
      %s29 = ssub.s32 24576, 24576
      %30 = vsyncadd [#allocation6], %s29
      %s31 = sshll.u32 [#allocation5], 4
      %s32 = int_to_ptr.vmem [resolvable:$true] %s31
      %37 = dma.hbm_to_vmem [thread:$0]  %s1, 24576, %s32, [#allocation6], 256, 256, 16
    $region9: #{_classifier_head_impl.1} parent=1 // pred_fallthru
      _
    // Predicated region
    $region10: #{_classifier_head_impl.1} parent=1 // pred_check
      _
    $region11: #{_classifier_head_impl.1} parent=1 // pred_check_branch
      %39 = sbr.rel (0) target = $region13
    $region12: #{_classifier_head_impl.1} parent=1 // pred_region
      %s41 = ssub.s32 64, 64
      %42 = vsyncadd [#allocation6], %s41
      %s44 = sshll.u32 [#allocation7], 4
      %s45 = int_to_ptr.vmem [resolvable:$true] %s44
      %47 = dma.hbm_to_vmem [thread:$0]  %s2, 64, %s45, [#allocation6]
    $region13: #{_classifier_head_impl.1} parent=1 // pred_fallthru
      _
    // Predicated region
    $region14: #{_classifier_head_impl.1} parent=1 // pred_check
      _
    $region15: #{_classifier_head_impl.1} parent=1 // pred_check_branch
      %49 = sbr.rel (0) target = $region17
    $region16: #{_classifier_head_impl.1} parent=1 // pred_region
      %s51 = ssub.s32 4096, 4096
      %52 = vsyncadd [#allocation9], %s51
      %s53 = sshll.u32 [#allocation8], 4
      %s54 = int_to_ptr.vmem [resolvable:$true] %s53
      %59 = dma.hbm_to_vmem [thread:$0]  %s3, 4096, %s54, [#allocation9], 64, 64, 4
    $region17: #{_classifier_head_impl.1} parent=1 // pred_fallthru
      _
    // Predicated region
    $region18: #{_classifier_head_impl.1} parent=1 // pred_check
      _
    $region19: #{_classifier_head_impl.1} parent=1 // pred_check_branch
      %61 = sbr.rel (0) target = $region21
    $region20: #{_classifier_head_impl.1} parent=1 // pred_region
      _
    $region21: #{_classifier_head_impl.1} parent=1 // pred_fallthru
      _
    // Predicated region
    $region22: #{_classifier_head_impl.1} parent=1 // pred_check
      _
    $region23: #{_classifier_head_impl.1} parent=1 // pred_check_branch
      %63 = sbr.rel (0) target = $region25
    $region24: #{_classifier_head_impl.1} parent=1 // pred_region
      %64 = dma.done [#allocation3], 1536
    $region25: #{_classifier_head_impl.1} parent=1 // pred_fallthru
      _
    // Predicated region
    $region26: #{_classifier_head_impl.1} parent=1 // pred_check
      _
    $region27: #{_classifier_head_impl.1} parent=1 // pred_check_branch
      %66 = sbr.rel (0) target = $region29
    $region28: #{_classifier_head_impl.1} parent=1 // pred_region
      %67 = dma.done [#allocation6], 24576
    $region29: #{_classifier_head_impl.1} parent=1 // pred_fallthru
      _
    // Predicated region
    $region30: #{_classifier_head_impl.1} parent=1 // pred_check
      _
    $region31: #{_classifier_head_impl.1} parent=1 // pred_check_branch
      %69 = sbr.rel (0) target = $region33
    $region32: #{_classifier_head_impl.1} parent=1 // pred_region
      %70 = dma.done [#allocation6], 64
    $region33: #{_classifier_head_impl.1} parent=1 // pred_fallthru
      _
    // Predicated region
    $region34: #{_classifier_head_impl.1} parent=1 // pred_check
      _
    $region35: #{_classifier_head_impl.1} parent=1 // pred_check_branch
      %72 = sbr.rel (0) target = $region37
    $region36: #{_classifier_head_impl.1} parent=1 // pred_region
      %73 = dma.done [#allocation9], 4096
    $region37: #{_classifier_head_impl.1} parent=1 // pred_fallthru
      _
    %v75 = vld [vmem:[#allocation2] sm:$0xff]
    %v76 = vld [vmem:[#allocation2 + $0x8] sm:$0xff]
    %v77 = vld [vmem:[#allocation2 + $0x10] sm:$0xff]
    %v78 = vld [vmem:[#allocation2 + $0x18] sm:$0xff]
    %v79 = vld [vmem:[#allocation2 + $0x20] sm:$0xff]
    %v80 = vld [vmem:[#allocation2 + $0x28] sm:$0xff]
    %v81 = vld [vmem:[#allocation2 + $0x30] sm:$0xff]
    %v82 = vld [vmem:[#allocation2 + $0x38] sm:$0xff]
    %v83 = vld [vmem:[#allocation2 + $0x40] sm:$0xff]
    %v84 = vld [vmem:[#allocation2 + $0x48] sm:$0xff]
    %v85 = vld [vmem:[#allocation2 + $0x50] sm:$0xff]
    %v86 = vld [vmem:[#allocation2 + $0x58] sm:$0xff]
    %v87 = vpack.c.bf16 %v81, %v75
    %v88 = vpack.c.bf16 %v82, %v76
    %v89 = vpack.c.bf16 %v83, %v77
    %v90 = vpack.c.bf16 %v84, %v78
    %v91 = vpack.c.bf16 %v85, %v79
    %v92 = vpack.c.bf16 %v86, %v80
    %v93 = vld [vmem:[#allocation5] sm:$0xff]
    %v94 = vld [vmem:[#allocation5 + $0x8] sm:$0xff]
    %v95 = vld [vmem:[#allocation5 + $0x10] sm:$0xff]
    %v96 = vld [vmem:[#allocation5 + $0x18] sm:$0xff]
    %v97 = vld [vmem:[#allocation5 + $0x20] sm:$0xff]
    %v98 = vld [vmem:[#allocation5 + $0x28] sm:$0xff]
    %v99 = vld [vmem:[#allocation5 + $0x30] sm:$0xff]
    %v100 = vld [vmem:[#allocation5 + $0x38] sm:$0xff]
    %v101 = vld [vmem:[#allocation5 + $0x40] sm:$0xff]
    %v102 = vld [vmem:[#allocation5 + $0x48] sm:$0xff]
    %v103 = vld [vmem:[#allocation5 + $0x50] sm:$0xff]
    %v104 = vld [vmem:[#allocation5 + $0x58] sm:$0xff]
    %v105 = vld [vmem:[#allocation5 + $0x60] sm:$0xff]
    %v106 = vld [vmem:[#allocation5 + $0x68] sm:$0xff]
    %v107 = vld [vmem:[#allocation5 + $0x70] sm:$0xff]
    %v108 = vld [vmem:[#allocation5 + $0x78] sm:$0xff]
    %v109 = vld [vmem:[#allocation5 + $0x80] sm:$0xff]
    %v110 = vld [vmem:[#allocation5 + $0x88] sm:$0xff]
    %v111 = vld [vmem:[#allocation5 + $0x90] sm:$0xff]
    %v112 = vld [vmem:[#allocation5 + $0x98] sm:$0xff]
    %v113 = vld [vmem:[#allocation5 + $0xa0] sm:$0xff]
    %v114 = vld [vmem:[#allocation5 + $0xa8] sm:$0xff]
    %v115 = vld [vmem:[#allocation5 + $0xb0] sm:$0xff]
    %v116 = vld [vmem:[#allocation5 + $0xb8] sm:$0xff]
    %v117 = vld [vmem:[#allocation5 + $0xc0] sm:$0xff]
    %v118 = vld [vmem:[#allocation5 + $0xc8] sm:$0xff]
    %v119 = vld [vmem:[#allocation5 + $0xd0] sm:$0xff]
    %v120 = vld [vmem:[#allocation5 + $0xd8] sm:$0xff]
    %v121 = vld [vmem:[#allocation5 + $0xe0] sm:$0xff]
    %v122 = vld [vmem:[#allocation5 + $0xe8] sm:$0xff]
    %v123 = vld [vmem:[#allocation5 + $0xf0] sm:$0xff]
    %v124 = vld [vmem:[#allocation5 + $0xf8] sm:$0xff]
    %v125 = vld [vmem:[#allocation5 + $0x100] sm:$0xff]
    %v126 = vld [vmem:[#allocation5 + $0x108] sm:$0xff]
    %v127 = vld [vmem:[#allocation5 + $0x110] sm:$0xff]
    %v128 = vld [vmem:[#allocation5 + $0x118] sm:$0xff]
    %v129 = vld [vmem:[#allocation5 + $0x120] sm:$0xff]
    %v130 = vld [vmem:[#allocation5 + $0x128] sm:$0xff]
    %v131 = vld [vmem:[#allocation5 + $0x130] sm:$0xff]
    %v132 = vld [vmem:[#allocation5 + $0x138] sm:$0xff]
    %v133 = vld [vmem:[#allocation5 + $0x140] sm:$0xff]
    %v134 = vld [vmem:[#allocation5 + $0x148] sm:$0xff]
    %v135 = vld [vmem:[#allocation5 + $0x150] sm:$0xff]
    %v136 = vld [vmem:[#allocation5 + $0x158] sm:$0xff]
    %v137 = vld [vmem:[#allocation5 + $0x160] sm:$0xff]
    %v138 = vld [vmem:[#allocation5 + $0x168] sm:$0xff]
    %v139 = vld [vmem:[#allocation5 + $0x170] sm:$0xff]
    %v140 = vld [vmem:[#allocation5 + $0x178] sm:$0xff]
    %v141 = vld [vmem:[#allocation5 + $0x180] sm:$0xff]
    %v142 = vld [vmem:[#allocation5 + $0x188] sm:$0xff]
    %v143 = vld [vmem:[#allocation5 + $0x190] sm:$0xff]
    %v144 = vld [vmem:[#allocation5 + $0x198] sm:$0xff]
    %v145 = vld [vmem:[#allocation5 + $0x1a0] sm:$0xff]
    %v146 = vld [vmem:[#allocation5 + $0x1a8] sm:$0xff]
    %v147 = vld [vmem:[#allocation5 + $0x1b0] sm:$0xff]
    %v148 = vld [vmem:[#allocation5 + $0x1b8] sm:$0xff]
    %v149 = vld [vmem:[#allocation5 + $0x1c0] sm:$0xff]
    %v150 = vld [vmem:[#allocation5 + $0x1c8] sm:$0xff]
    %v151 = vld [vmem:[#allocation5 + $0x1d0] sm:$0xff]
    %v152 = vld [vmem:[#allocation5 + $0x1d8] sm:$0xff]
    %v153 = vld [vmem:[#allocation5 + $0x1e0] sm:$0xff]
    %v154 = vld [vmem:[#allocation5 + $0x1e8] sm:$0xff]
    %v155 = vld [vmem:[#allocation5 + $0x1f0] sm:$0xff]
    %v156 = vld [vmem:[#allocation5 + $0x1f8] sm:$0xff]
    %v157 = vld [vmem:[#allocation5 + $0x200] sm:$0xff]
    %v158 = vld [vmem:[#allocation5 + $0x208] sm:$0xff]
    %v159 = vld [vmem:[#allocation5 + $0x210] sm:$0xff]
    %v160 = vld [vmem:[#allocation5 + $0x218] sm:$0xff]
    %v161 = vld [vmem:[#allocation5 + $0x220] sm:$0xff]
    %v162 = vld [vmem:[#allocation5 + $0x228] sm:$0xff]
    %v163 = vld [vmem:[#allocation5 + $0x230] sm:$0xff]
    %v164 = vld [vmem:[#allocation5 + $0x238] sm:$0xff]
    %v165 = vld [vmem:[#allocation5 + $0x240] sm:$0xff]
    %v166 = vld [vmem:[#allocation5 + $0x248] sm:$0xff]
    %v167 = vld [vmem:[#allocation5 + $0x250] sm:$0xff]
    %v168 = vld [vmem:[#allocation5 + $0x258] sm:$0xff]
    %v169 = vld [vmem:[#allocation5 + $0x260] sm:$0xff]
    %v170 = vld [vmem:[#allocation5 + $0x268] sm:$0xff]
    %v171 = vld [vmem:[#allocation5 + $0x270] sm:$0xff]
    %v172 = vld [vmem:[#allocation5 + $0x278] sm:$0xff]
    %v173 = vld [vmem:[#allocation5 + $0x280] sm:$0xff]
    %v174 = vld [vmem:[#allocation5 + $0x288] sm:$0xff]
    %v175 = vld [vmem:[#allocation5 + $0x290] sm:$0xff]
    %v176 = vld [vmem:[#allocation5 + $0x298] sm:$0xff]
    %v177 = vld [vmem:[#allocation5 + $0x2a0] sm:$0xff]
    %v178 = vld [vmem:[#allocation5 + $0x2a8] sm:$0xff]
    %v179 = vld [vmem:[#allocation5 + $0x2b0] sm:$0xff]
    %v180 = vld [vmem:[#allocation5 + $0x2b8] sm:$0xff]
    %v181 = vld [vmem:[#allocation5 + $0x2c0] sm:$0xff]
    %v182 = vld [vmem:[#allocation5 + $0x2c8] sm:$0xff]
    %v183 = vld [vmem:[#allocation5 + $0x2d0] sm:$0xff]
    %v184 = vld [vmem:[#allocation5 + $0x2d8] sm:$0xff]
    %v185 = vld [vmem:[#allocation5 + $0x2e0] sm:$0xff]
    %v186 = vld [vmem:[#allocation5 + $0x2e8] sm:$0xff]
    %v187 = vld [vmem:[#allocation5 + $0x2f0] sm:$0xff]
    %v188 = vld [vmem:[#allocation5 + $0x2f8] sm:$0xff]
    %v189 = vld [vmem:[#allocation5 + $0x300] sm:$0xff]
    %v190 = vld [vmem:[#allocation5 + $0x308] sm:$0xff]
    %v191 = vld [vmem:[#allocation5 + $0x310] sm:$0xff]
    %v192 = vld [vmem:[#allocation5 + $0x318] sm:$0xff]
    %v193 = vld [vmem:[#allocation5 + $0x320] sm:$0xff]
    %v194 = vld [vmem:[#allocation5 + $0x328] sm:$0xff]
    %v195 = vld [vmem:[#allocation5 + $0x330] sm:$0xff]
    %v196 = vld [vmem:[#allocation5 + $0x338] sm:$0xff]
    %v197 = vld [vmem:[#allocation5 + $0x340] sm:$0xff]
    %v198 = vld [vmem:[#allocation5 + $0x348] sm:$0xff]
    %v199 = vld [vmem:[#allocation5 + $0x350] sm:$0xff]
    %v200 = vld [vmem:[#allocation5 + $0x358] sm:$0xff]
    %v201 = vld [vmem:[#allocation5 + $0x360] sm:$0xff]
    %v202 = vld [vmem:[#allocation5 + $0x368] sm:$0xff]
    %v203 = vld [vmem:[#allocation5 + $0x370] sm:$0xff]
    %v204 = vld [vmem:[#allocation5 + $0x378] sm:$0xff]
    %v205 = vld [vmem:[#allocation5 + $0x380] sm:$0xff]
    %v206 = vld [vmem:[#allocation5 + $0x388] sm:$0xff]
    %v207 = vld [vmem:[#allocation5 + $0x390] sm:$0xff]
    %v208 = vld [vmem:[#allocation5 + $0x398] sm:$0xff]
    %v209 = vld [vmem:[#allocation5 + $0x3a0] sm:$0xff]
    %v210 = vld [vmem:[#allocation5 + $0x3a8] sm:$0xff]
    %v211 = vld [vmem:[#allocation5 + $0x3b0] sm:$0xff]
    %v212 = vld [vmem:[#allocation5 + $0x3b8] sm:$0xff]
    %v213 = vld [vmem:[#allocation5 + $0x3c0] sm:$0xff]
    %v214 = vld [vmem:[#allocation5 + $0x3c8] sm:$0xff]
    %v215 = vld [vmem:[#allocation5 + $0x3d0] sm:$0xff]
    %v216 = vld [vmem:[#allocation5 + $0x3d8] sm:$0xff]
    %v217 = vld [vmem:[#allocation5 + $0x3e0] sm:$0xff]
    %v218 = vld [vmem:[#allocation5 + $0x3e8] sm:$0xff]
    %v219 = vld [vmem:[#allocation5 + $0x3f0] sm:$0xff]
    %v220 = vld [vmem:[#allocation5 + $0x3f8] sm:$0xff]
    %v221 = vld [vmem:[#allocation5 + $0x400] sm:$0xff]
    %v222 = vld [vmem:[#allocation5 + $0x408] sm:$0xff]
    %v223 = vld [vmem:[#allocation5 + $0x410] sm:$0xff]
    %v224 = vld [vmem:[#allocation5 + $0x418] sm:$0xff]
    %v225 = vld [vmem:[#allocation5 + $0x420] sm:$0xff]
    %v226 = vld [vmem:[#allocation5 + $0x428] sm:$0xff]
    %v227 = vld [vmem:[#allocation5 + $0x430] sm:$0xff]
    %v228 = vld [vmem:[#allocation5 + $0x438] sm:$0xff]
    %v229 = vld [vmem:[#allocation5 + $0x440] sm:$0xff]
    %v230 = vld [vmem:[#allocation5 + $0x448] sm:$0xff]
    %v231 = vld [vmem:[#allocation5 + $0x450] sm:$0xff]
    %v232 = vld [vmem:[#allocation5 + $0x458] sm:$0xff]
    %v233 = vld [vmem:[#allocation5 + $0x460] sm:$0xff]
    %v234 = vld [vmem:[#allocation5 + $0x468] sm:$0xff]
    %v235 = vld [vmem:[#allocation5 + $0x470] sm:$0xff]
    %v236 = vld [vmem:[#allocation5 + $0x478] sm:$0xff]
    %v237 = vld [vmem:[#allocation5 + $0x480] sm:$0xff]
    %v238 = vld [vmem:[#allocation5 + $0x488] sm:$0xff]
    %v239 = vld [vmem:[#allocation5 + $0x490] sm:$0xff]
    %v240 = vld [vmem:[#allocation5 + $0x498] sm:$0xff]
    %v241 = vld [vmem:[#allocation5 + $0x4a0] sm:$0xff]
    %v242 = vld [vmem:[#allocation5 + $0x4a8] sm:$0xff]
    %v243 = vld [vmem:[#allocation5 + $0x4b0] sm:$0xff]
    %v244 = vld [vmem:[#allocation5 + $0x4b8] sm:$0xff]
    %v245 = vld [vmem:[#allocation5 + $0x4c0] sm:$0xff]
    %v246 = vld [vmem:[#allocation5 + $0x4c8] sm:$0xff]
    %v247 = vld [vmem:[#allocation5 + $0x4d0] sm:$0xff]
    %v248 = vld [vmem:[#allocation5 + $0x4d8] sm:$0xff]
    %v249 = vld [vmem:[#allocation5 + $0x4e0] sm:$0xff]
    %v250 = vld [vmem:[#allocation5 + $0x4e8] sm:$0xff]
    %v251 = vld [vmem:[#allocation5 + $0x4f0] sm:$0xff]
    %v252 = vld [vmem:[#allocation5 + $0x4f8] sm:$0xff]
    %v253 = vld [vmem:[#allocation5 + $0x500] sm:$0xff]
    %v254 = vld [vmem:[#allocation5 + $0x508] sm:$0xff]
    %v255 = vld [vmem:[#allocation5 + $0x510] sm:$0xff]
    %v256 = vld [vmem:[#allocation5 + $0x518] sm:$0xff]
    %v257 = vld [vmem:[#allocation5 + $0x520] sm:$0xff]
    %v258 = vld [vmem:[#allocation5 + $0x528] sm:$0xff]
    %v259 = vld [vmem:[#allocation5 + $0x530] sm:$0xff]
    %v260 = vld [vmem:[#allocation5 + $0x538] sm:$0xff]
    %v261 = vld [vmem:[#allocation5 + $0x540] sm:$0xff]
    %v262 = vld [vmem:[#allocation5 + $0x548] sm:$0xff]
    %v263 = vld [vmem:[#allocation5 + $0x550] sm:$0xff]
    %v264 = vld [vmem:[#allocation5 + $0x558] sm:$0xff]
    %v265 = vld [vmem:[#allocation5 + $0x560] sm:$0xff]
    %v266 = vld [vmem:[#allocation5 + $0x568] sm:$0xff]
    %v267 = vld [vmem:[#allocation5 + $0x570] sm:$0xff]
    %v268 = vld [vmem:[#allocation5 + $0x578] sm:$0xff]
    %v269 = vld [vmem:[#allocation5 + $0x580] sm:$0xff]
    %v270 = vld [vmem:[#allocation5 + $0x588] sm:$0xff]
    %v271 = vld [vmem:[#allocation5 + $0x590] sm:$0xff]
    %v272 = vld [vmem:[#allocation5 + $0x598] sm:$0xff]
    %v273 = vld [vmem:[#allocation5 + $0x5a0] sm:$0xff]
    %v274 = vld [vmem:[#allocation5 + $0x5a8] sm:$0xff]
    %v275 = vld [vmem:[#allocation5 + $0x5b0] sm:$0xff]
    %v276 = vld [vmem:[#allocation5 + $0x5b8] sm:$0xff]
    %v277 = vld [vmem:[#allocation5 + $0x5c0] sm:$0xff]
    %v278 = vld [vmem:[#allocation5 + $0x5c8] sm:$0xff]
    %v279 = vld [vmem:[#allocation5 + $0x5d0] sm:$0xff]
    %v280 = vld [vmem:[#allocation5 + $0x5d8] sm:$0xff]
    %v281 = vld [vmem:[#allocation5 + $0x5e0] sm:$0xff]
    %v282 = vld [vmem:[#allocation5 + $0x5e8] sm:$0xff]
    %v283 = vld [vmem:[#allocation5 + $0x5f0] sm:$0xff]
    %v284 = vld [vmem:[#allocation5 + $0x5f8] sm:$0xff]
    %v285 = vld [vmem:[#allocation7] sm:$0xf]
    %v287 = vlaneseq
    %v288 = vshrl.u32 %v287, 7
    %v289 = vsub.s32 0, %v288
    %v290 = vrot.slane %v285, %v289
    %v291 = vlaneseq
    %v292 = vshrl.u32 %v291, 7
    %v293 = vsub.s32 1, %v292
    %v294 = vrot.slane %v285, %v293
    %v295 = vlaneseq
    %v296 = vshrl.u32 %v295, 7
    %v297 = vsub.s32 2, %v296
    %v298 = vrot.slane %v285, %v297
    %v299 = vlaneseq
    %v300 = vshrl.u32 %v299, 7
    %v301 = vsub.s32 3, %v300
    %v302 = vrot.slane %v285, %v301
    %v499 = vunpack.c.l.b16 %v93
    %v500 = vunpack.c.h.b16 %v93
    %v501 = vunpack.c.l.b16 %v94
    %v502 = vunpack.c.h.b16 %v94
    %v503 = vunpack.c.l.b16 %v95
    %v504 = vunpack.c.h.b16 %v95
    %v505 = vunpack.c.l.b16 %v96
    %v506 = vunpack.c.h.b16 %v96
    %v507 = vunpack.c.l.b16 %v97
    %v508 = vunpack.c.h.b16 %v97
    %v509 = vunpack.c.l.b16 %v98
    %v510 = vunpack.c.h.b16 %v98
    %v511 = vunpack.c.l.b16 %v99
    %v512 = vunpack.c.h.b16 %v99
    %v513 = vunpack.c.l.b16 %v100
    %v514 = vunpack.c.h.b16 %v100
    %v515 = vunpack.c.l.b16 %v101
    %v516 = vunpack.c.h.b16 %v101
    %v517 = vunpack.c.l.b16 %v102
    %v518 = vunpack.c.h.b16 %v102
    %v519 = vunpack.c.l.b16 %v103
    %v520 = vunpack.c.h.b16 %v103
    %v521 = vunpack.c.l.b16 %v104
    %v522 = vunpack.c.h.b16 %v104
    %v523 = vunpack.c.l.b16 %v105
    %v524 = vunpack.c.h.b16 %v105
    %v525 = vunpack.c.l.b16 %v106
    %v526 = vunpack.c.h.b16 %v106
    %v527 = vunpack.c.l.b16 %v107
    %v528 = vunpack.c.h.b16 %v107
    %v529 = vunpack.c.l.b16 %v108
    %v530 = vunpack.c.h.b16 %v108
    %v531 = vunpack.c.l.b16 %v109
    %v532 = vunpack.c.h.b16 %v109
    %v533 = vunpack.c.l.b16 %v110
    %v534 = vunpack.c.h.b16 %v110
    %v535 = vunpack.c.l.b16 %v111
    %v536 = vunpack.c.h.b16 %v111
    %v537 = vunpack.c.l.b16 %v112
    %v538 = vunpack.c.h.b16 %v112
    %v539 = vunpack.c.l.b16 %v113
    %v540 = vunpack.c.h.b16 %v113
    %v541 = vunpack.c.l.b16 %v114
    %v542 = vunpack.c.h.b16 %v114
    %v543 = vunpack.c.l.b16 %v115
    %v544 = vunpack.c.h.b16 %v115
    %v545 = vunpack.c.l.b16 %v116
    %v546 = vunpack.c.h.b16 %v116
    %v547 = vunpack.c.l.b16 %v117
    %v548 = vunpack.c.h.b16 %v117
    %v549 = vunpack.c.l.b16 %v118
    %v550 = vunpack.c.h.b16 %v118
    %v551 = vunpack.c.l.b16 %v119
    %v552 = vunpack.c.h.b16 %v119
    %v553 = vunpack.c.l.b16 %v120
    %v554 = vunpack.c.h.b16 %v120
    %v555 = vunpack.c.l.b16 %v121
    %v556 = vunpack.c.h.b16 %v121
    %v557 = vunpack.c.l.b16 %v122
    %v558 = vunpack.c.h.b16 %v122
    %v559 = vunpack.c.l.b16 %v123
    %v560 = vunpack.c.h.b16 %v123
    %v561 = vunpack.c.l.b16 %v124
    %v562 = vunpack.c.h.b16 %v124
    %v563 = vunpack.c.l.b16 %v125
    %v564 = vunpack.c.h.b16 %v125
    %v565 = vunpack.c.l.b16 %v126
    %v566 = vunpack.c.h.b16 %v126
    %v567 = vunpack.c.l.b16 %v127
    %v568 = vunpack.c.h.b16 %v127
    %v569 = vunpack.c.l.b16 %v128
    %v570 = vunpack.c.h.b16 %v128
    %v571 = vunpack.c.l.b16 %v129
    %v572 = vunpack.c.h.b16 %v129
    %v573 = vunpack.c.l.b16 %v130
    %v574 = vunpack.c.h.b16 %v130
    %v575 = vunpack.c.l.b16 %v131
    %v576 = vunpack.c.h.b16 %v131
    %v577 = vunpack.c.l.b16 %v132
    %v578 = vunpack.c.h.b16 %v132
    %v579 = vunpack.c.l.b16 %v133
    %v580 = vunpack.c.h.b16 %v133
    %v581 = vunpack.c.l.b16 %v134
    %v582 = vunpack.c.h.b16 %v134
    %v583 = vunpack.c.l.b16 %v135
    %v584 = vunpack.c.h.b16 %v135
    %v585 = vunpack.c.l.b16 %v136
    %v586 = vunpack.c.h.b16 %v136
    %v587 = vunpack.c.l.b16 %v137
    %v588 = vunpack.c.h.b16 %v137
    %v589 = vunpack.c.l.b16 %v138
    %v590 = vunpack.c.h.b16 %v138
    %v591 = vunpack.c.l.b16 %v139
    %v592 = vunpack.c.h.b16 %v139
    %v593 = vunpack.c.l.b16 %v140
    %v594 = vunpack.c.h.b16 %v140
    %v595 = vunpack.c.l.b16 %v141
    %v596 = vunpack.c.h.b16 %v141
    %v597 = vunpack.c.l.b16 %v142
    %v598 = vunpack.c.h.b16 %v142
    %v599 = vunpack.c.l.b16 %v143
    %v600 = vunpack.c.h.b16 %v143
    %v601 = vunpack.c.l.b16 %v144
    %v602 = vunpack.c.h.b16 %v144
    %v603 = vunpack.c.l.b16 %v145
    %v604 = vunpack.c.h.b16 %v145
    %v605 = vunpack.c.l.b16 %v146
    %v606 = vunpack.c.h.b16 %v146
    %v607 = vunpack.c.l.b16 %v147
    %v608 = vunpack.c.h.b16 %v147
    %v609 = vunpack.c.l.b16 %v148
    %v610 = vunpack.c.h.b16 %v148
    %v611 = vunpack.c.l.b16 %v149
    %v612 = vunpack.c.h.b16 %v149
    %v613 = vunpack.c.l.b16 %v150
    %v614 = vunpack.c.h.b16 %v150
    %v615 = vunpack.c.l.b16 %v151
    %v616 = vunpack.c.h.b16 %v151
    %v617 = vunpack.c.l.b16 %v152
    %v618 = vunpack.c.h.b16 %v152
    %v619 = vunpack.c.l.b16 %v153
    %v620 = vunpack.c.h.b16 %v153
    %v621 = vunpack.c.l.b16 %v154
    %v622 = vunpack.c.h.b16 %v154
    %v623 = vunpack.c.l.b16 %v155
    %v624 = vunpack.c.h.b16 %v155
    %v625 = vunpack.c.l.b16 %v156
    %v626 = vunpack.c.h.b16 %v156
    %v627 = vunpack.c.l.b16 %v157
    %v628 = vunpack.c.h.b16 %v157
    %v629 = vunpack.c.l.b16 %v158
    %v630 = vunpack.c.h.b16 %v158
    %v631 = vunpack.c.l.b16 %v159
    %v632 = vunpack.c.h.b16 %v159
    %v633 = vunpack.c.l.b16 %v160
    %v634 = vunpack.c.h.b16 %v160
    %v635 = vunpack.c.l.b16 %v161
    %v636 = vunpack.c.h.b16 %v161
    %v637 = vunpack.c.l.b16 %v162
    %v638 = vunpack.c.h.b16 %v162
    %v639 = vunpack.c.l.b16 %v163
    %v640 = vunpack.c.h.b16 %v163
    %v641 = vunpack.c.l.b16 %v164
    %v642 = vunpack.c.h.b16 %v164
    %v643 = vunpack.c.l.b16 %v165
    %v644 = vunpack.c.h.b16 %v165
    %v645 = vunpack.c.l.b16 %v166
    %v646 = vunpack.c.h.b16 %v166
    %v647 = vunpack.c.l.b16 %v167
    %v648 = vunpack.c.h.b16 %v167
    %v649 = vunpack.c.l.b16 %v168
    %v650 = vunpack.c.h.b16 %v168
    %v651 = vunpack.c.l.b16 %v169
    %v652 = vunpack.c.h.b16 %v169
    %v653 = vunpack.c.l.b16 %v170
    %v654 = vunpack.c.h.b16 %v170
    %v655 = vunpack.c.l.b16 %v171
    %v656 = vunpack.c.h.b16 %v171
    %v657 = vunpack.c.l.b16 %v172
    %v658 = vunpack.c.h.b16 %v172
    %v659 = vunpack.c.l.b16 %v173
    %v660 = vunpack.c.h.b16 %v173
    %v661 = vunpack.c.l.b16 %v174
    %v662 = vunpack.c.h.b16 %v174
    %v663 = vunpack.c.l.b16 %v175
    %v664 = vunpack.c.h.b16 %v175
    %v665 = vunpack.c.l.b16 %v176
    %v666 = vunpack.c.h.b16 %v176
    %v667 = vunpack.c.l.b16 %v177
    %v668 = vunpack.c.h.b16 %v177
    %v669 = vunpack.c.l.b16 %v178
    %v670 = vunpack.c.h.b16 %v178
    %v671 = vunpack.c.l.b16 %v179
    %v672 = vunpack.c.h.b16 %v179
    %v673 = vunpack.c.l.b16 %v180
    %v674 = vunpack.c.h.b16 %v180
    %v675 = vunpack.c.l.b16 %v181
    %v676 = vunpack.c.h.b16 %v181
    %v677 = vunpack.c.l.b16 %v182
    %v678 = vunpack.c.h.b16 %v182
    %v679 = vunpack.c.l.b16 %v183
    %v680 = vunpack.c.h.b16 %v183
    %v681 = vunpack.c.l.b16 %v184
    %v682 = vunpack.c.h.b16 %v184
    %v683 = vunpack.c.l.b16 %v185
    %v684 = vunpack.c.h.b16 %v185
    %v685 = vunpack.c.l.b16 %v186
    %v686 = vunpack.c.h.b16 %v186
    %v687 = vunpack.c.l.b16 %v187
    %v688 = vunpack.c.h.b16 %v187
    %v689 = vunpack.c.l.b16 %v188
    %v690 = vunpack.c.h.b16 %v188
    %v691 = vunpack.c.l.b16 %v189
    %v692 = vunpack.c.h.b16 %v189
    %v693 = vunpack.c.l.b16 %v190
    %v694 = vunpack.c.h.b16 %v190
    %v695 = vunpack.c.l.b16 %v191
    %v696 = vunpack.c.h.b16 %v191
    %v697 = vunpack.c.l.b16 %v192
    %v698 = vunpack.c.h.b16 %v192
    %v699 = vunpack.c.l.b16 %v193
    %v700 = vunpack.c.h.b16 %v193
    %v701 = vunpack.c.l.b16 %v194
    %v702 = vunpack.c.h.b16 %v194
    %v703 = vunpack.c.l.b16 %v195
    %v704 = vunpack.c.h.b16 %v195
    %v705 = vunpack.c.l.b16 %v196
    %v706 = vunpack.c.h.b16 %v196
    %v707 = vunpack.c.l.b16 %v197
    %v708 = vunpack.c.h.b16 %v197
    %v709 = vunpack.c.l.b16 %v198
    %v710 = vunpack.c.h.b16 %v198
    %v711 = vunpack.c.l.b16 %v199
    %v712 = vunpack.c.h.b16 %v199
    %v713 = vunpack.c.l.b16 %v200
    %v714 = vunpack.c.h.b16 %v200
    %v715 = vunpack.c.l.b16 %v201
    %v716 = vunpack.c.h.b16 %v201
    %v717 = vunpack.c.l.b16 %v202
    %v718 = vunpack.c.h.b16 %v202
    %v719 = vunpack.c.l.b16 %v203
    %v720 = vunpack.c.h.b16 %v203
    %v721 = vunpack.c.l.b16 %v204
    %v722 = vunpack.c.h.b16 %v204
    %v723 = vunpack.c.l.b16 %v205
    %v724 = vunpack.c.h.b16 %v205
    %v725 = vunpack.c.l.b16 %v206
    %v726 = vunpack.c.h.b16 %v206
    %v727 = vunpack.c.l.b16 %v207
    %v728 = vunpack.c.h.b16 %v207
    %v729 = vunpack.c.l.b16 %v208
    %v730 = vunpack.c.h.b16 %v208
    %v731 = vunpack.c.l.b16 %v209
    %v732 = vunpack.c.h.b16 %v209
    %v733 = vunpack.c.l.b16 %v210
    %v734 = vunpack.c.h.b16 %v210
    %v735 = vunpack.c.l.b16 %v211
    %v736 = vunpack.c.h.b16 %v211
    %v737 = vunpack.c.l.b16 %v212
    %v738 = vunpack.c.h.b16 %v212
    %v739 = vunpack.c.l.b16 %v213
    %v740 = vunpack.c.h.b16 %v213
    %v741 = vunpack.c.l.b16 %v214
    %v742 = vunpack.c.h.b16 %v214
    %v743 = vunpack.c.l.b16 %v215
    %v744 = vunpack.c.h.b16 %v215
    %v745 = vunpack.c.l.b16 %v216
    %v746 = vunpack.c.h.b16 %v216
    %v747 = vunpack.c.l.b16 %v217
    %v748 = vunpack.c.h.b16 %v217
    %v749 = vunpack.c.l.b16 %v218
    %v750 = vunpack.c.h.b16 %v218
    %v751 = vunpack.c.l.b16 %v219
    %v752 = vunpack.c.h.b16 %v219
    %v753 = vunpack.c.l.b16 %v220
    %v754 = vunpack.c.h.b16 %v220
    %v755 = vunpack.c.l.b16 %v221
    %v756 = vunpack.c.h.b16 %v221
    %v757 = vunpack.c.l.b16 %v222
    %v758 = vunpack.c.h.b16 %v222
    %v759 = vunpack.c.l.b16 %v223
    %v760 = vunpack.c.h.b16 %v223
    %v761 = vunpack.c.l.b16 %v224
    %v762 = vunpack.c.h.b16 %v224
    %v763 = vunpack.c.l.b16 %v225
    %v764 = vunpack.c.h.b16 %v225
    %v765 = vunpack.c.l.b16 %v226
    %v766 = vunpack.c.h.b16 %v226
    %v767 = vunpack.c.l.b16 %v227
    %v768 = vunpack.c.h.b16 %v227
    %v769 = vunpack.c.l.b16 %v228
    %v770 = vunpack.c.h.b16 %v228
    %v771 = vunpack.c.l.b16 %v229
    %v772 = vunpack.c.h.b16 %v229
    %v773 = vunpack.c.l.b16 %v230
    %v774 = vunpack.c.h.b16 %v230
    %v775 = vunpack.c.l.b16 %v231
    %v776 = vunpack.c.h.b16 %v231
    %v777 = vunpack.c.l.b16 %v232
    %v778 = vunpack.c.h.b16 %v232
    %v779 = vunpack.c.l.b16 %v233
    %v780 = vunpack.c.h.b16 %v233
    %v781 = vunpack.c.l.b16 %v234
    %v782 = vunpack.c.h.b16 %v234
    %v783 = vunpack.c.l.b16 %v235
    %v784 = vunpack.c.h.b16 %v235
    %v785 = vunpack.c.l.b16 %v236
    %v786 = vunpack.c.h.b16 %v236
    %v787 = vunpack.c.l.b16 %v237
    %v788 = vunpack.c.h.b16 %v237
    %v789 = vunpack.c.l.b16 %v238
    %v790 = vunpack.c.h.b16 %v238
    %v791 = vunpack.c.l.b16 %v239
    %v792 = vunpack.c.h.b16 %v239
    %v793 = vunpack.c.l.b16 %v240
    %v794 = vunpack.c.h.b16 %v240
    %v795 = vunpack.c.l.b16 %v241
    %v796 = vunpack.c.h.b16 %v241
    %v797 = vunpack.c.l.b16 %v242
    %v798 = vunpack.c.h.b16 %v242
    %v799 = vunpack.c.l.b16 %v243
    %v800 = vunpack.c.h.b16 %v243
    %v801 = vunpack.c.l.b16 %v244
    %v802 = vunpack.c.h.b16 %v244
    %v803 = vunpack.c.l.b16 %v245
    %v804 = vunpack.c.h.b16 %v245
    %v805 = vunpack.c.l.b16 %v246
    %v806 = vunpack.c.h.b16 %v246
    %v807 = vunpack.c.l.b16 %v247
    %v808 = vunpack.c.h.b16 %v247
    %v809 = vunpack.c.l.b16 %v248
    %v810 = vunpack.c.h.b16 %v248
    %v811 = vunpack.c.l.b16 %v249
    %v812 = vunpack.c.h.b16 %v249
    %v813 = vunpack.c.l.b16 %v250
    %v814 = vunpack.c.h.b16 %v250
    %v815 = vunpack.c.l.b16 %v251
    %v816 = vunpack.c.h.b16 %v251
    %v817 = vunpack.c.l.b16 %v252
    %v818 = vunpack.c.h.b16 %v252
    %v819 = vunpack.c.l.b16 %v253
    %v820 = vunpack.c.h.b16 %v253
    %v821 = vunpack.c.l.b16 %v254
    %v822 = vunpack.c.h.b16 %v254
    %v823 = vunpack.c.l.b16 %v255
    %v824 = vunpack.c.h.b16 %v255
    %v825 = vunpack.c.l.b16 %v256
    %v826 = vunpack.c.h.b16 %v256
    %v827 = vunpack.c.l.b16 %v257
    %v828 = vunpack.c.h.b16 %v257
    %v829 = vunpack.c.l.b16 %v258
    %v830 = vunpack.c.h.b16 %v258
    %v831 = vunpack.c.l.b16 %v259
    %v832 = vunpack.c.h.b16 %v259
    %v833 = vunpack.c.l.b16 %v260
    %v834 = vunpack.c.h.b16 %v260
    %v835 = vunpack.c.l.b16 %v261
    %v836 = vunpack.c.h.b16 %v261
    %v837 = vunpack.c.l.b16 %v262
    %v838 = vunpack.c.h.b16 %v262
    %v839 = vunpack.c.l.b16 %v263
    %v840 = vunpack.c.h.b16 %v263
    %v841 = vunpack.c.l.b16 %v264
    %v842 = vunpack.c.h.b16 %v264
    %v843 = vunpack.c.l.b16 %v265
    %v844 = vunpack.c.h.b16 %v265
    %v845 = vunpack.c.l.b16 %v266
    %v846 = vunpack.c.h.b16 %v266
    %v847 = vunpack.c.l.b16 %v267
    %v848 = vunpack.c.h.b16 %v267
    %v849 = vunpack.c.l.b16 %v268
    %v850 = vunpack.c.h.b16 %v268
    %v851 = vunpack.c.l.b16 %v269
    %v852 = vunpack.c.h.b16 %v269
    %v853 = vunpack.c.l.b16 %v270
    %v854 = vunpack.c.h.b16 %v270
    %v855 = vunpack.c.l.b16 %v271
    %v856 = vunpack.c.h.b16 %v271
    %v857 = vunpack.c.l.b16 %v272
    %v858 = vunpack.c.h.b16 %v272
    %v859 = vunpack.c.l.b16 %v273
    %v860 = vunpack.c.h.b16 %v273
    %v861 = vunpack.c.l.b16 %v274
    %v862 = vunpack.c.h.b16 %v274
    %v863 = vunpack.c.l.b16 %v275
    %v864 = vunpack.c.h.b16 %v275
    %v865 = vunpack.c.l.b16 %v276
    %v866 = vunpack.c.h.b16 %v276
    %v867 = vunpack.c.l.b16 %v277
    %v868 = vunpack.c.h.b16 %v277
    %v869 = vunpack.c.l.b16 %v278
    %v870 = vunpack.c.h.b16 %v278
    %v871 = vunpack.c.l.b16 %v279
    %v872 = vunpack.c.h.b16 %v279
    %v873 = vunpack.c.l.b16 %v280
    %v874 = vunpack.c.h.b16 %v280
    %v875 = vunpack.c.l.b16 %v281
    %v876 = vunpack.c.h.b16 %v281
    %v877 = vunpack.c.l.b16 %v282
    %v878 = vunpack.c.h.b16 %v282
    %v879 = vunpack.c.l.b16 %v283
    %v880 = vunpack.c.h.b16 %v283
    %v881 = vunpack.c.l.b16 %v284
    %v882 = vunpack.c.h.b16 %v284
    %v883 = vpack.c.b16 %v503, %v499
    %v884 = vpack.c.b16 %v504, %v500
    %v885 = vpack.c.b16 %v505, %v501
    %v886 = vpack.c.b16 %v506, %v502
    %v887 = vpack.c.b16 %v511, %v507
    %v888 = vpack.c.b16 %v512, %v508
    %v889 = vpack.c.b16 %v513, %v509
    %v890 = vpack.c.b16 %v514, %v510
    %v891 = vpack.c.b16 %v519, %v515
    %v892 = vpack.c.b16 %v520, %v516
    %v893 = vpack.c.b16 %v521, %v517
    %v894 = vpack.c.b16 %v522, %v518
    %v895 = vpack.c.b16 %v527, %v523
    %v896 = vpack.c.b16 %v528, %v524
    %v897 = vpack.c.b16 %v529, %v525
    %v898 = vpack.c.b16 %v530, %v526
    %v899 = vpack.c.b16 %v535, %v531
    %v900 = vpack.c.b16 %v536, %v532
    %v901 = vpack.c.b16 %v537, %v533
    %v902 = vpack.c.b16 %v538, %v534
    %v903 = vpack.c.b16 %v543, %v539
    %v904 = vpack.c.b16 %v544, %v540
    %v905 = vpack.c.b16 %v545, %v541
    %v906 = vpack.c.b16 %v546, %v542
    %v907 = vpack.c.b16 %v551, %v547
    %v908 = vpack.c.b16 %v552, %v548
    %v909 = vpack.c.b16 %v553, %v549
    %v910 = vpack.c.b16 %v554, %v550
    %v911 = vpack.c.b16 %v559, %v555
    %v912 = vpack.c.b16 %v560, %v556
    %v913 = vpack.c.b16 %v561, %v557
    %v914 = vpack.c.b16 %v562, %v558
    %v915 = vpack.c.b16 %v567, %v563
    %v916 = vpack.c.b16 %v568, %v564
    %v917 = vpack.c.b16 %v569, %v565
    %v918 = vpack.c.b16 %v570, %v566
    %v919 = vpack.c.b16 %v575, %v571
    %v920 = vpack.c.b16 %v576, %v572
    %v921 = vpack.c.b16 %v577, %v573
    %v922 = vpack.c.b16 %v578, %v574
    %v923 = vpack.c.b16 %v583, %v579
    %v924 = vpack.c.b16 %v584, %v580
    %v925 = vpack.c.b16 %v585, %v581
    %v926 = vpack.c.b16 %v586, %v582
    %v927 = vpack.c.b16 %v591, %v587
    %v928 = vpack.c.b16 %v592, %v588
    %v929 = vpack.c.b16 %v593, %v589
    %v930 = vpack.c.b16 %v594, %v590
    %v931 = vpack.c.b16 %v599, %v595
    %v932 = vpack.c.b16 %v600, %v596
    %v933 = vpack.c.b16 %v601, %v597
    %v934 = vpack.c.b16 %v602, %v598
    %v935 = vpack.c.b16 %v607, %v603
    %v936 = vpack.c.b16 %v608, %v604
    %v937 = vpack.c.b16 %v609, %v605
    %v938 = vpack.c.b16 %v610, %v606
    %v939 = vpack.c.b16 %v615, %v611
    %v940 = vpack.c.b16 %v616, %v612
    %v941 = vpack.c.b16 %v617, %v613
    %v942 = vpack.c.b16 %v618, %v614
    %v943 = vpack.c.b16 %v623, %v619
    %v944 = vpack.c.b16 %v624, %v620
    %v945 = vpack.c.b16 %v625, %v621
    %v946 = vpack.c.b16 %v626, %v622
    %v947 = vpack.c.b16 %v631, %v627
    %v948 = vpack.c.b16 %v632, %v628
    %v949 = vpack.c.b16 %v633, %v629
    %v950 = vpack.c.b16 %v634, %v630
    %v951 = vpack.c.b16 %v639, %v635
    %v952 = vpack.c.b16 %v640, %v636
    %v953 = vpack.c.b16 %v641, %v637
    %v954 = vpack.c.b16 %v642, %v638
    %v955 = vpack.c.b16 %v647, %v643
    %v956 = vpack.c.b16 %v648, %v644
    %v957 = vpack.c.b16 %v649, %v645
    %v958 = vpack.c.b16 %v650, %v646
    %v959 = vpack.c.b16 %v655, %v651
    %v960 = vpack.c.b16 %v656, %v652
    %v961 = vpack.c.b16 %v657, %v653
    %v962 = vpack.c.b16 %v658, %v654
    %v963 = vpack.c.b16 %v663, %v659
    %v964 = vpack.c.b16 %v664, %v660
    %v965 = vpack.c.b16 %v665, %v661
    %v966 = vpack.c.b16 %v666, %v662
    %v967 = vpack.c.b16 %v671, %v667
    %v968 = vpack.c.b16 %v672, %v668
    %v969 = vpack.c.b16 %v673, %v669
    %v970 = vpack.c.b16 %v674, %v670
    %v971 = vpack.c.b16 %v679, %v675
    %v972 = vpack.c.b16 %v680, %v676
    %v973 = vpack.c.b16 %v681, %v677
    %v974 = vpack.c.b16 %v682, %v678
    %v975 = vpack.c.b16 %v687, %v683
    %v976 = vpack.c.b16 %v688, %v684
    %v977 = vpack.c.b16 %v689, %v685
    %v978 = vpack.c.b16 %v690, %v686
    %v979 = vpack.c.b16 %v695, %v691
    %v980 = vpack.c.b16 %v696, %v692
    %v981 = vpack.c.b16 %v697, %v693
    %v982 = vpack.c.b16 %v698, %v694
    %v983 = vpack.c.b16 %v703, %v699
    %v984 = vpack.c.b16 %v704, %v700
    %v985 = vpack.c.b16 %v705, %v701
    %v986 = vpack.c.b16 %v706, %v702
    %v987 = vpack.c.b16 %v711, %v707
    %v988 = vpack.c.b16 %v712, %v708
    %v989 = vpack.c.b16 %v713, %v709
    %v990 = vpack.c.b16 %v714, %v710
    %v991 = vpack.c.b16 %v719, %v715
    %v992 = vpack.c.b16 %v720, %v716
    %v993 = vpack.c.b16 %v721, %v717
    %v994 = vpack.c.b16 %v722, %v718
    %v995 = vpack.c.b16 %v727, %v723
    %v996 = vpack.c.b16 %v728, %v724
    %v997 = vpack.c.b16 %v729, %v725
    %v998 = vpack.c.b16 %v730, %v726
    %v999 = vpack.c.b16 %v735, %v731
    %v1000 = vpack.c.b16 %v736, %v732
    %v1001 = vpack.c.b16 %v737, %v733
    %v1002 = vpack.c.b16 %v738, %v734
    %v1003 = vpack.c.b16 %v743, %v739
    %v1004 = vpack.c.b16 %v744, %v740
    %v1005 = vpack.c.b16 %v745, %v741
    %v1006 = vpack.c.b16 %v746, %v742
    %v1007 = vpack.c.b16 %v751, %v747
    %v1008 = vpack.c.b16 %v752, %v748
    %v1009 = vpack.c.b16 %v753, %v749
    %v1010 = vpack.c.b16 %v754, %v750
    %v1011 = vpack.c.b16 %v759, %v755
    %v1012 = vpack.c.b16 %v760, %v756
    %v1013 = vpack.c.b16 %v761, %v757
    %v1014 = vpack.c.b16 %v762, %v758
    %v1015 = vpack.c.b16 %v767, %v763
    %v1016 = vpack.c.b16 %v768, %v764
    %v1017 = vpack.c.b16 %v769, %v765
    %v1018 = vpack.c.b16 %v770, %v766
    %v1019 = vpack.c.b16 %v775, %v771
    %v1020 = vpack.c.b16 %v776, %v772
    %v1021 = vpack.c.b16 %v777, %v773
    %v1022 = vpack.c.b16 %v778, %v774
    %v1023 = vpack.c.b16 %v783, %v779
    %v1024 = vpack.c.b16 %v784, %v780
    %v1025 = vpack.c.b16 %v785, %v781
    %v1026 = vpack.c.b16 %v786, %v782
    %v1027 = vpack.c.b16 %v791, %v787
    %v1028 = vpack.c.b16 %v792, %v788
    %v1029 = vpack.c.b16 %v793, %v789
    %v1030 = vpack.c.b16 %v794, %v790
    %v1031 = vpack.c.b16 %v799, %v795
    %v1032 = vpack.c.b16 %v800, %v796
    %v1033 = vpack.c.b16 %v801, %v797
    %v1034 = vpack.c.b16 %v802, %v798
    %v1035 = vpack.c.b16 %v807, %v803
    %v1036 = vpack.c.b16 %v808, %v804
    %v1037 = vpack.c.b16 %v809, %v805
    %v1038 = vpack.c.b16 %v810, %v806
    %v1039 = vpack.c.b16 %v815, %v811
    %v1040 = vpack.c.b16 %v816, %v812
    %v1041 = vpack.c.b16 %v817, %v813
    %v1042 = vpack.c.b16 %v818, %v814
    %v1043 = vpack.c.b16 %v823, %v819
    %v1044 = vpack.c.b16 %v824, %v820
    %v1045 = vpack.c.b16 %v825, %v821
    %v1046 = vpack.c.b16 %v826, %v822
    %v1047 = vpack.c.b16 %v831, %v827
    %v1048 = vpack.c.b16 %v832, %v828
    %v1049 = vpack.c.b16 %v833, %v829
    %v1050 = vpack.c.b16 %v834, %v830
    %v1051 = vpack.c.b16 %v839, %v835
    %v1052 = vpack.c.b16 %v840, %v836
    %v1053 = vpack.c.b16 %v841, %v837
    %v1054 = vpack.c.b16 %v842, %v838
    %v1055 = vpack.c.b16 %v847, %v843
    %v1056 = vpack.c.b16 %v848, %v844
    %v1057 = vpack.c.b16 %v849, %v845
    %v1058 = vpack.c.b16 %v850, %v846
    %v1059 = vpack.c.b16 %v855, %v851
    %v1060 = vpack.c.b16 %v856, %v852
    %v1061 = vpack.c.b16 %v857, %v853
    %v1062 = vpack.c.b16 %v858, %v854
    %v1063 = vpack.c.b16 %v863, %v859
    %v1064 = vpack.c.b16 %v864, %v860
    %v1065 = vpack.c.b16 %v865, %v861
    %v1066 = vpack.c.b16 %v866, %v862
    %v1067 = vpack.c.b16 %v871, %v867
    %v1068 = vpack.c.b16 %v872, %v868
    %v1069 = vpack.c.b16 %v873, %v869
    %v1070 = vpack.c.b16 %v874, %v870
    %v1071 = vpack.c.b16 %v879, %v875
    %v1072 = vpack.c.b16 %v880, %v876
    %v1073 = vpack.c.b16 %v881, %v877
    %v1074 = vpack.c.b16 %v882, %v878
    %1267 = vmatprep.subr.bf16.mxu0 %v912
    %1268 = vmatpush1.bf16.msra.mxu0 %v911
    %1269 = vmatprep.subr.bf16.mxu0 %v908
    %1270 = vmatpush1.bf16.msra.mxu0 %v907
    %1271 = vmatprep.subr.bf16.mxu0 %v904
    %1272 = vmatpush1.bf16.msra.mxu0 %v903
    %1273 = vmatprep.subr.bf16.mxu0 %v900
    %1274 = vmatpush1.bf16.msra.mxu0 %v899
    %1275 = vmatprep.subr.bf16.mxu0 %v896
    %1276 = vmatpush1.bf16.msra.mxu0 %v895
    %1277 = vmatprep.subr.bf16.mxu0 %v892
    %1278 = vmatpush1.bf16.msra.mxu0 %v891
    %1279 = vmatprep.subr.bf16.mxu0 %v888
    %1280 = vmatpush1.bf16.msra.mxu0 %v887
    %1281 = vmatprep.subr.bf16.mxu0 %v884
    %1282 = vmatpush1.bf16.msra.mxu0 %v883
    %1283 = vmatprep.subr.bf16.mxu0 %v944
    %1284 = vmatpush2.bf16.msra.mxu0 %v943
    %1285 = vmatprep.subr.bf16.mxu0 %v940
    %1286 = vmatpush2.bf16.msra.mxu0 %v939
    %1287 = vmatprep.subr.bf16.mxu0 %v936
    %1288 = vmatpush2.bf16.msra.mxu0 %v935
    %1289 = vmatprep.subr.bf16.mxu0 %v932
    %1290 = vmatpush2.bf16.msra.mxu0 %v931
    %1291 = vmatprep.subr.bf16.mxu0 %v928
    %1292 = vmatpush2.bf16.msra.mxu0 %v927
    %1293 = vmatprep.subr.bf16.mxu0 %v924
    %1294 = vmatpush2.bf16.msra.mxu0 %v923
    %1295 = vmatprep.subr.bf16.mxu0 %v920
    %1296 = vmatpush2.bf16.msra.mxu0 %v919
    %1297 = vmatprep.subr.bf16.mxu0 %v916
    %1298 = vmatpush2.bf16.msra.mxu0 %v915
    %1299 = vmatprep.mubr.bf16.mxu0 %v88
    %1300 = vmatmul.mubr.bf16.gmra.mxu0 %v87
    %v1301 = vpop.f32.mrf.mxu0
    %v1302 = vadd.f32 %v290, %v1301
    %v1303 = vpop.f32.mrf.mxu0
    %v1304 = vadd.f32 %v294, %v1303
    %v1305 = vpop.f32.mrf.mxu0
    %v1306 = vadd.f32 %v290, %v1305
    %v1307 = vpop.f32.mrf.mxu0
    %v1308 = vadd.f32 %v294, %v1307
    %1309 = vdwg.mxu0
    %1310 = vmatprep.subr.bf16.mxu0 %v976
    %1311 = vmatpush1.bf16.msra.mxu0 %v975
    %1312 = vmatprep.subr.bf16.mxu0 %v972
    %1313 = vmatpush1.bf16.msra.mxu0 %v971
    %1314 = vmatprep.subr.bf16.mxu0 %v968
    %1315 = vmatpush1.bf16.msra.mxu0 %v967
    %1316 = vmatprep.subr.bf16.mxu0 %v964
    %1317 = vmatpush1.bf16.msra.mxu0 %v963
    %1318 = vmatprep.subr.bf16.mxu0 %v960
    %1319 = vmatpush1.bf16.msra.mxu0 %v959
    %1320 = vmatprep.subr.bf16.mxu0 %v956
    %1321 = vmatpush1.bf16.msra.mxu0 %v955
    %1322 = vmatprep.subr.bf16.mxu0 %v952
    %1323 = vmatpush1.bf16.msra.mxu0 %v951
    %1324 = vmatprep.subr.bf16.mxu0 %v948
    %1325 = vmatpush1.bf16.msra.mxu0 %v947
    %1326 = vmatprep.subr.bf16.mxu0 %v1008
    %1327 = vmatpush2.bf16.msra.mxu0 %v1007
    %1328 = vmatprep.subr.bf16.mxu0 %v1004
    %1329 = vmatpush2.bf16.msra.mxu0 %v1003
    %1330 = vmatprep.subr.bf16.mxu0 %v1000
    %1331 = vmatpush2.bf16.msra.mxu0 %v999
    %1332 = vmatprep.subr.bf16.mxu0 %v996
    %1333 = vmatpush2.bf16.msra.mxu0 %v995
    %1334 = vmatprep.subr.bf16.mxu0 %v992
    %1335 = vmatpush2.bf16.msra.mxu0 %v991
    %1336 = vmatprep.subr.bf16.mxu0 %v988
    %1337 = vmatpush2.bf16.msra.mxu0 %v987
    %1338 = vmatprep.subr.bf16.mxu0 %v984
    %1339 = vmatpush2.bf16.msra.mxu0 %v983
    %1340 = vmatprep.subr.bf16.mxu0 %v980
    %1341 = vmatpush2.bf16.msra.mxu0 %v979
    %1342 = vmatprep.mubr.bf16.mxu0 %v90
    %1343 = vmatmul.mubr.bf16.gmra.mxu0 %v89
    %v1344 = vpop.f32.mrf.mxu0
    %v1345 = vadd.f32 %v1302, %v1344
    %v1346 = vpop.f32.mrf.mxu0
    %v1347 = vadd.f32 %v1304, %v1346
    %v1348 = vpop.f32.mrf.mxu0
    %v1349 = vadd.f32 %v1306, %v1348
    %v1350 = vpop.f32.mrf.mxu0
    %v1351 = vadd.f32 %v1308, %v1350
    %1352 = vdwg.mxu0
    %1353 = vmatprep.subr.bf16.mxu0 %v1040
    %1354 = vmatpush1.bf16.msra.mxu0 %v1039
    %1355 = vmatprep.subr.bf16.mxu0 %v1036
    %1356 = vmatpush1.bf16.msra.mxu0 %v1035
    %1357 = vmatprep.subr.bf16.mxu0 %v1032
    %1358 = vmatpush1.bf16.msra.mxu0 %v1031
    %1359 = vmatprep.subr.bf16.mxu0 %v1028
    %1360 = vmatpush1.bf16.msra.mxu0 %v1027
    %1361 = vmatprep.subr.bf16.mxu0 %v1024
    %1362 = vmatpush1.bf16.msra.mxu0 %v1023
    %1363 = vmatprep.subr.bf16.mxu0 %v1020
    %1364 = vmatpush1.bf16.msra.mxu0 %v1019
    %1365 = vmatprep.subr.bf16.mxu0 %v1016
    %1366 = vmatpush1.bf16.msra.mxu0 %v1015
    %1367 = vmatprep.subr.bf16.mxu0 %v1012
    %1368 = vmatpush1.bf16.msra.mxu0 %v1011
    %1369 = vmatprep.subr.bf16.mxu0 %v1072
    %1370 = vmatpush2.bf16.msra.mxu0 %v1071
    %1371 = vmatprep.subr.bf16.mxu0 %v1068
    %1372 = vmatpush2.bf16.msra.mxu0 %v1067
    %1373 = vmatprep.subr.bf16.mxu0 %v1064
    %1374 = vmatpush2.bf16.msra.mxu0 %v1063
    %1375 = vmatprep.subr.bf16.mxu0 %v1060
    %1376 = vmatpush2.bf16.msra.mxu0 %v1059
    %1377 = vmatprep.subr.bf16.mxu0 %v1056
    %1378 = vmatpush2.bf16.msra.mxu0 %v1055
    %1379 = vmatprep.subr.bf16.mxu0 %v1052
    %1380 = vmatpush2.bf16.msra.mxu0 %v1051
    %1381 = vmatprep.subr.bf16.mxu0 %v1048
    %1382 = vmatpush2.bf16.msra.mxu0 %v1047
    %1383 = vmatprep.subr.bf16.mxu0 %v1044
    %1384 = vmatpush2.bf16.msra.mxu0 %v1043
    %1385 = vmatprep.mubr.bf16.mxu0 %v92
    %1386 = vmatmul.mubr.bf16.gmra.mxu0 %v91
    %v1387 = vpop.f32.mrf.mxu0
    %v1388 = vadd.f32 %v1345, %v1387
    %v1389 = vpop.f32.mrf.mxu0
    %v1390 = vadd.f32 %v1347, %v1389
    %v1391 = vpop.f32.mrf.mxu0
    %v1392 = vadd.f32 %v1349, %v1391
    %v1393 = vpop.f32.mrf.mxu0
    %v1394 = vadd.f32 %v1351, %v1393
    %1395 = vdwg.mxu0
    %1396 = vmatprep.subr.bf16.mxu0 %v914
    %1397 = vmatpush1.bf16.msra.mxu0 %v913
    %1398 = vmatprep.subr.bf16.mxu0 %v910
    %1399 = vmatpush1.bf16.msra.mxu0 %v909
    %1400 = vmatprep.subr.bf16.mxu0 %v906
    %1401 = vmatpush1.bf16.msra.mxu0 %v905
    %1402 = vmatprep.subr.bf16.mxu0 %v902
    %1403 = vmatpush1.bf16.msra.mxu0 %v901
    %1404 = vmatprep.subr.bf16.mxu0 %v898
    %1405 = vmatpush1.bf16.msra.mxu0 %v897
    %1406 = vmatprep.subr.bf16.mxu0 %v894
    %1407 = vmatpush1.bf16.msra.mxu0 %v893
    %1408 = vmatprep.subr.bf16.mxu0 %v890
    %1409 = vmatpush1.bf16.msra.mxu0 %v889
    %1410 = vmatprep.subr.bf16.mxu0 %v886
    %1411 = vmatpush1.bf16.msra.mxu0 %v885
    %1412 = vmatprep.subr.bf16.mxu0 %v946
    %1413 = vmatpush2.bf16.msra.mxu0 %v945
    %1414 = vmatprep.subr.bf16.mxu0 %v942
    %1415 = vmatpush2.bf16.msra.mxu0 %v941
    %1416 = vmatprep.subr.bf16.mxu0 %v938
    %1417 = vmatpush2.bf16.msra.mxu0 %v937
    %1418 = vmatprep.subr.bf16.mxu0 %v934
    %1419 = vmatpush2.bf16.msra.mxu0 %v933
    %1420 = vmatprep.subr.bf16.mxu0 %v930
    %1421 = vmatpush2.bf16.msra.mxu0 %v929
    %1422 = vmatprep.subr.bf16.mxu0 %v926
    %1423 = vmatpush2.bf16.msra.mxu0 %v925
    %1424 = vmatprep.subr.bf16.mxu0 %v922
    %1425 = vmatpush2.bf16.msra.mxu0 %v921
    %1426 = vmatprep.subr.bf16.mxu0 %v918
    %1427 = vmatpush2.bf16.msra.mxu0 %v917
    %1428 = vmatprep.mubr.bf16.mxu0 %v88
    %1429 = vmatmul.mubr.bf16.gmra.mxu0 %v87
    %v1430 = vpop.f32.mrf.mxu0
    %v1431 = vadd.f32 %v298, %v1430
    %v1432 = vpop.f32.mrf.mxu0
    %v1433 = vadd.f32 %v302, %v1432
    %v1434 = vpop.f32.mrf.mxu0
    %v1435 = vadd.f32 %v298, %v1434
    %v1436 = vpop.f32.mrf.mxu0
    %v1437 = vadd.f32 %v302, %v1436
    %1438 = vdwg.mxu0
    %1439 = vmatprep.subr.bf16.mxu0 %v978
    %1440 = vmatpush1.bf16.msra.mxu0 %v977
    %1441 = vmatprep.subr.bf16.mxu0 %v974
    %1442 = vmatpush1.bf16.msra.mxu0 %v973
    %1443 = vmatprep.subr.bf16.mxu0 %v970
    %1444 = vmatpush1.bf16.msra.mxu0 %v969
    %1445 = vmatprep.subr.bf16.mxu0 %v966
    %1446 = vmatpush1.bf16.msra.mxu0 %v965
    %1447 = vmatprep.subr.bf16.mxu0 %v962
    %1448 = vmatpush1.bf16.msra.mxu0 %v961
    %1449 = vmatprep.subr.bf16.mxu0 %v958
    %1450 = vmatpush1.bf16.msra.mxu0 %v957
    %1451 = vmatprep.subr.bf16.mxu0 %v954
    %1452 = vmatpush1.bf16.msra.mxu0 %v953
    %1453 = vmatprep.subr.bf16.mxu0 %v950
    %1454 = vmatpush1.bf16.msra.mxu0 %v949
    %1455 = vmatprep.subr.bf16.mxu0 %v1010
    %1456 = vmatpush2.bf16.msra.mxu0 %v1009
    %1457 = vmatprep.subr.bf16.mxu0 %v1006
    %1458 = vmatpush2.bf16.msra.mxu0 %v1005
    %1459 = vmatprep.subr.bf16.mxu0 %v1002
    %1460 = vmatpush2.bf16.msra.mxu0 %v1001
    %1461 = vmatprep.subr.bf16.mxu0 %v998
    %1462 = vmatpush2.bf16.msra.mxu0 %v997
    %1463 = vmatprep.subr.bf16.mxu0 %v994
    %1464 = vmatpush2.bf16.msra.mxu0 %v993
    %1465 = vmatprep.subr.bf16.mxu0 %v990
    %1466 = vmatpush2.bf16.msra.mxu0 %v989
    %1467 = vmatprep.subr.bf16.mxu0 %v986
    %1468 = vmatpush2.bf16.msra.mxu0 %v985
    %1469 = vmatprep.subr.bf16.mxu0 %v982
    %1470 = vmatpush2.bf16.msra.mxu0 %v981
    %1471 = vmatprep.mubr.bf16.mxu0 %v90
    %1472 = vmatmul.mubr.bf16.gmra.mxu0 %v89
    %v1473 = vpop.f32.mrf.mxu0
    %v1474 = vadd.f32 %v1431, %v1473
    %v1475 = vpop.f32.mrf.mxu0
    %v1476 = vadd.f32 %v1433, %v1475
    %v1477 = vpop.f32.mrf.mxu0
    %v1478 = vadd.f32 %v1435, %v1477
    %v1479 = vpop.f32.mrf.mxu0
    %v1480 = vadd.f32 %v1437, %v1479
    %1481 = vdwg.mxu0
    %1482 = vmatprep.subr.bf16.mxu0 %v1042
    %1483 = vmatpush1.bf16.msra.mxu0 %v1041
    %1484 = vmatprep.subr.bf16.mxu0 %v1038
    %1485 = vmatpush1.bf16.msra.mxu0 %v1037
    %1486 = vmatprep.subr.bf16.mxu0 %v1034
    %1487 = vmatpush1.bf16.msra.mxu0 %v1033
    %1488 = vmatprep.subr.bf16.mxu0 %v1030
    %1489 = vmatpush1.bf16.msra.mxu0 %v1029
    %1490 = vmatprep.subr.bf16.mxu0 %v1026
    %1491 = vmatpush1.bf16.msra.mxu0 %v1025
    %1492 = vmatprep.subr.bf16.mxu0 %v1022
    %1493 = vmatpush1.bf16.msra.mxu0 %v1021
    %1494 = vmatprep.subr.bf16.mxu0 %v1018
    %1495 = vmatpush1.bf16.msra.mxu0 %v1017
    %1496 = vmatprep.subr.bf16.mxu0 %v1014
    %1497 = vmatpush1.bf16.msra.mxu0 %v1013
    %1498 = vmatprep.subr.bf16.mxu0 %v1074
    %1499 = vmatpush2.bf16.msra.mxu0 %v1073
    %1500 = vmatprep.subr.bf16.mxu0 %v1070
    %1501 = vmatpush2.bf16.msra.mxu0 %v1069
    %1502 = vmatprep.subr.bf16.mxu0 %v1066
    %1503 = vmatpush2.bf16.msra.mxu0 %v1065
    %1504 = vmatprep.subr.bf16.mxu0 %v1062
    %1505 = vmatpush2.bf16.msra.mxu0 %v1061
    %1506 = vmatprep.subr.bf16.mxu0 %v1058
    %1507 = vmatpush2.bf16.msra.mxu0 %v1057
    %1508 = vmatprep.subr.bf16.mxu0 %v1054
    %1509 = vmatpush2.bf16.msra.mxu0 %v1053
    %1510 = vmatprep.subr.bf16.mxu0 %v1050
    %1511 = vmatpush2.bf16.msra.mxu0 %v1049
    %1512 = vmatprep.subr.bf16.mxu0 %v1046
    %1513 = vmatpush2.bf16.msra.mxu0 %v1045
    %1514 = vmatprep.mubr.bf16.mxu0 %v92
    %1515 = vmatmul.mubr.bf16.gmra.mxu0 %v91
    %v1516 = vpop.f32.mrf.mxu0
    %v1517 = vadd.f32 %v1474, %v1516
    %v1518 = vpop.f32.mrf.mxu0
    %v1519 = vadd.f32 %v1476, %v1518
    %v1520 = vpop.f32.mrf.mxu0
    %v1521 = vadd.f32 %v1478, %v1520
    %v1522 = vpop.f32.mrf.mxu0
    %v1523 = vadd.f32 %v1480, %v1522
    %1524 = vdwg.mxu0
    %v1525 = vmax.f32 %v1388, 0.0
    %v1526 = vmax.f32 %v1390, 0.0
    %v1527 = vmax.f32 %v1517, 0.0
    %v1528 = vmax.f32 %v1519, 0.0
    %v1529 = vmax.f32 %v1392, 0.0
    %v1530 = vmax.f32 %v1394, 0.0
    %v1531 = vmax.f32 %v1521, 0.0
    %v1532 = vmax.f32 %v1523, 0.0
    %v1533 = vpack.c.bf16 %v1529, %v1525
    %v1534 = vpack.c.bf16 %v1530, %v1526
    %v1535 = vpack.c.bf16 %v1531, %v1527
    %v1536 = vpack.c.bf16 %v1532, %v1528
    %v1537 = vld [vmem:[#allocation8] sm:$0xf]
    %v1538 = vld [vmem:[#allocation8 + $0x4] sm:$0xf]
    %v1539 = vld [vmem:[#allocation8 + $0x8] sm:$0xf]
    %v1540 = vld [vmem:[#allocation8 + $0xc] sm:$0xf]
    %v1541 = vld [vmem:[#allocation8 + $0x10] sm:$0xf]
    %v1542 = vld [vmem:[#allocation8 + $0x14] sm:$0xf]
    %v1543 = vld [vmem:[#allocation8 + $0x18] sm:$0xf]
    %v1544 = vld [vmem:[#allocation8 + $0x1c] sm:$0xf]
    %v1545 = vld [vmem:[#allocation8 + $0x20] sm:$0xf]
    %v1546 = vld [vmem:[#allocation8 + $0x24] sm:$0xf]
    %v1547 = vld [vmem:[#allocation8 + $0x28] sm:$0xf]
    %v1548 = vld [vmem:[#allocation8 + $0x2c] sm:$0xf]
    %v1549 = vld [vmem:[#allocation8 + $0x30] sm:$0xf]
    %v1550 = vld [vmem:[#allocation8 + $0x34] sm:$0xf]
    %v1551 = vld [vmem:[#allocation8 + $0x38] sm:$0xf]
    %v1552 = vld [vmem:[#allocation8 + $0x3c] sm:$0xf]
    %v1553 = vld [vmem:[#allocation8 + $0x40] sm:$0xf]
    %v1554 = vld [vmem:[#allocation8 + $0x44] sm:$0xf]
    %v1555 = vld [vmem:[#allocation8 + $0x48] sm:$0xf]
    %v1556 = vld [vmem:[#allocation8 + $0x4c] sm:$0xf]
    %v1557 = vld [vmem:[#allocation8 + $0x50] sm:$0xf]
    %v1558 = vld [vmem:[#allocation8 + $0x54] sm:$0xf]
    %v1559 = vld [vmem:[#allocation8 + $0x58] sm:$0xf]
    %v1560 = vld [vmem:[#allocation8 + $0x5c] sm:$0xf]
    %v1561 = vld [vmem:[#allocation8 + $0x60] sm:$0xf]
    %v1562 = vld [vmem:[#allocation8 + $0x64] sm:$0xf]
    %v1563 = vld [vmem:[#allocation8 + $0x68] sm:$0xf]
    %v1564 = vld [vmem:[#allocation8 + $0x6c] sm:$0xf]
    %v1565 = vld [vmem:[#allocation8 + $0x70] sm:$0xf]
    %v1566 = vld [vmem:[#allocation8 + $0x74] sm:$0xf]
    %v1567 = vld [vmem:[#allocation8 + $0x78] sm:$0xf]
    %v1568 = vld [vmem:[#allocation8 + $0x7c] sm:$0xf]
    %v1569 = vld [vmem:[#allocation8 + $0x80] sm:$0xf]
    %v1570 = vld [vmem:[#allocation8 + $0x84] sm:$0xf]
    %v1571 = vld [vmem:[#allocation8 + $0x88] sm:$0xf]
    %v1572 = vld [vmem:[#allocation8 + $0x8c] sm:$0xf]
    %v1573 = vld [vmem:[#allocation8 + $0x90] sm:$0xf]
    %v1574 = vld [vmem:[#allocation8 + $0x94] sm:$0xf]
    %v1575 = vld [vmem:[#allocation8 + $0x98] sm:$0xf]
    %v1576 = vld [vmem:[#allocation8 + $0x9c] sm:$0xf]
    %v1577 = vld [vmem:[#allocation8 + $0xa0] sm:$0xf]
    %v1578 = vld [vmem:[#allocation8 + $0xa4] sm:$0xf]
    %v1579 = vld [vmem:[#allocation8 + $0xa8] sm:$0xf]
    %v1580 = vld [vmem:[#allocation8 + $0xac] sm:$0xf]
    %v1581 = vld [vmem:[#allocation8 + $0xb0] sm:$0xf]
    %v1582 = vld [vmem:[#allocation8 + $0xb4] sm:$0xf]
    %v1583 = vld [vmem:[#allocation8 + $0xb8] sm:$0xf]
    %v1584 = vld [vmem:[#allocation8 + $0xbc] sm:$0xf]
    %v1585 = vld [vmem:[#allocation8 + $0xc0] sm:$0xf]
    %v1586 = vld [vmem:[#allocation8 + $0xc4] sm:$0xf]
    %v1587 = vld [vmem:[#allocation8 + $0xc8] sm:$0xf]
    %v1588 = vld [vmem:[#allocation8 + $0xcc] sm:$0xf]
    %v1589 = vld [vmem:[#allocation8 + $0xd0] sm:$0xf]
    %v1590 = vld [vmem:[#allocation8 + $0xd4] sm:$0xf]
    %v1591 = vld [vmem:[#allocation8 + $0xd8] sm:$0xf]
    %v1592 = vld [vmem:[#allocation8 + $0xdc] sm:$0xf]
    %v1593 = vld [vmem:[#allocation8 + $0xe0] sm:$0xf]
    %v1594 = vld [vmem:[#allocation8 + $0xe4] sm:$0xf]
    %v1595 = vld [vmem:[#allocation8 + $0xe8] sm:$0xf]
    %v1596 = vld [vmem:[#allocation8 + $0xec] sm:$0xf]
    %v1597 = vld [vmem:[#allocation8 + $0xf0] sm:$0xf]
    %v1598 = vld [vmem:[#allocation8 + $0xf4] sm:$0xf]
    %v1599 = vld [vmem:[#allocation8 + $0xf8] sm:$0xf]
    %v1600 = vld [vmem:[#allocation8 + $0xfc] sm:$0xf]
    %v1601 = vld [vmem:[%s4] sm:$0x1]
    %v1603 = vlaneseq
    %v1604 = vshrl.u32 %v1603, 7
    %v1605 = vsub.s32 0, %v1604
    %v1606 = vrot.slane %v1601, %v1605
    %v1672 = vunpack.c.l.b16 %v1537
    %v1673 = vunpack.c.l.b16 %v1538
    %v1674 = vunpack.c.l.b16 %v1539
    %v1675 = vunpack.c.l.b16 %v1540
    %v1676 = vunpack.c.l.b16 %v1541
    %v1677 = vunpack.c.l.b16 %v1542
    %v1678 = vunpack.c.l.b16 %v1543
    %v1679 = vunpack.c.l.b16 %v1544
    %v1680 = vunpack.c.l.b16 %v1545
    %v1681 = vunpack.c.l.b16 %v1546
    %v1682 = vunpack.c.l.b16 %v1547
    %v1683 = vunpack.c.l.b16 %v1548
    %v1684 = vunpack.c.l.b16 %v1549
    %v1685 = vunpack.c.l.b16 %v1550
    %v1686 = vunpack.c.l.b16 %v1551
    %v1687 = vunpack.c.l.b16 %v1552
    %v1688 = vunpack.c.l.b16 %v1553
    %v1689 = vunpack.c.l.b16 %v1554
    %v1690 = vunpack.c.l.b16 %v1555
    %v1691 = vunpack.c.l.b16 %v1556
    %v1692 = vunpack.c.l.b16 %v1557
    %v1693 = vunpack.c.l.b16 %v1558
    %v1694 = vunpack.c.l.b16 %v1559
    %v1695 = vunpack.c.l.b16 %v1560
    %v1696 = vunpack.c.l.b16 %v1561
    %v1697 = vunpack.c.l.b16 %v1562
    %v1698 = vunpack.c.l.b16 %v1563
    %v1699 = vunpack.c.l.b16 %v1564
    %v1700 = vunpack.c.l.b16 %v1565
    %v1701 = vunpack.c.l.b16 %v1566
    %v1702 = vunpack.c.l.b16 %v1567
    %v1703 = vunpack.c.l.b16 %v1568
    %v1704 = vunpack.c.l.b16 %v1569
    %v1705 = vunpack.c.l.b16 %v1570
    %v1706 = vunpack.c.l.b16 %v1571
    %v1707 = vunpack.c.l.b16 %v1572
    %v1708 = vunpack.c.l.b16 %v1573
    %v1709 = vunpack.c.l.b16 %v1574
    %v1710 = vunpack.c.l.b16 %v1575
    %v1711 = vunpack.c.l.b16 %v1576
    %v1712 = vunpack.c.l.b16 %v1577
    %v1713 = vunpack.c.l.b16 %v1578
    %v1714 = vunpack.c.l.b16 %v1579
    %v1715 = vunpack.c.l.b16 %v1580
    %v1716 = vunpack.c.l.b16 %v1581
    %v1717 = vunpack.c.l.b16 %v1582
    %v1718 = vunpack.c.l.b16 %v1583
    %v1719 = vunpack.c.l.b16 %v1584
    %v1720 = vunpack.c.l.b16 %v1585
    %v1721 = vunpack.c.l.b16 %v1586
    %v1722 = vunpack.c.l.b16 %v1587
    %v1723 = vunpack.c.l.b16 %v1588
    %v1724 = vunpack.c.l.b16 %v1589
    %v1725 = vunpack.c.l.b16 %v1590
    %v1726 = vunpack.c.l.b16 %v1591
    %v1727 = vunpack.c.l.b16 %v1592
    %v1728 = vunpack.c.l.b16 %v1593
    %v1729 = vunpack.c.l.b16 %v1594
    %v1730 = vunpack.c.l.b16 %v1595
    %v1731 = vunpack.c.l.b16 %v1596
    %v1732 = vunpack.c.l.b16 %v1597
    %v1733 = vunpack.c.l.b16 %v1598
    %v1734 = vunpack.c.l.b16 %v1599
    %v1735 = vunpack.c.l.b16 %v1600
    %v1736 = vpack.c.b16 %v1673, %v1672
    %v1737 = vpack.c.b16 %v1675, %v1674
    %v1738 = vpack.c.b16 %v1677, %v1676
    %v1739 = vpack.c.b16 %v1679, %v1678
    %v1740 = vpack.c.b16 %v1681, %v1680
    %v1741 = vpack.c.b16 %v1683, %v1682
    %v1742 = vpack.c.b16 %v1685, %v1684
    %v1743 = vpack.c.b16 %v1687, %v1686
    %v1744 = vpack.c.b16 %v1689, %v1688
    %v1745 = vpack.c.b16 %v1691, %v1690
    %v1746 = vpack.c.b16 %v1693, %v1692
    %v1747 = vpack.c.b16 %v1695, %v1694
    %v1748 = vpack.c.b16 %v1697, %v1696
    %v1749 = vpack.c.b16 %v1699, %v1698
    %v1750 = vpack.c.b16 %v1701, %v1700
    %v1751 = vpack.c.b16 %v1703, %v1702
    %v1752 = vpack.c.b16 %v1705, %v1704
    %v1753 = vpack.c.b16 %v1707, %v1706
    %v1754 = vpack.c.b16 %v1709, %v1708
    %v1755 = vpack.c.b16 %v1711, %v1710
    %v1756 = vpack.c.b16 %v1713, %v1712
    %v1757 = vpack.c.b16 %v1715, %v1714
    %v1758 = vpack.c.b16 %v1717, %v1716
    %v1759 = vpack.c.b16 %v1719, %v1718
    %v1760 = vpack.c.b16 %v1721, %v1720
    %v1761 = vpack.c.b16 %v1723, %v1722
    %v1762 = vpack.c.b16 %v1725, %v1724
    %v1763 = vpack.c.b16 %v1727, %v1726
    %v1764 = vpack.c.b16 %v1729, %v1728
    %v1765 = vpack.c.b16 %v1731, %v1730
    %v1766 = vpack.c.b16 %v1733, %v1732
    %v1767 = vpack.c.b16 %v1735, %v1734
    %1800 = vmatprep.subr.bf16.mxu0 0
    %1801 = vmatpush1.bf16.msra.mxu0 %v1743
    %1802 = vmatprep.subr.bf16.mxu0 0
    %1803 = vmatpush1.bf16.msra.mxu0 %v1742
    %1804 = vmatprep.subr.bf16.mxu0 0
    %1805 = vmatpush1.bf16.msra.mxu0 %v1741
    %1806 = vmatprep.subr.bf16.mxu0 0
    %1807 = vmatpush1.bf16.msra.mxu0 %v1740
    %1808 = vmatprep.subr.bf16.mxu0 0
    %1809 = vmatpush1.bf16.msra.mxu0 %v1739
    %1810 = vmatprep.subr.bf16.mxu0 0
    %1811 = vmatpush1.bf16.msra.mxu0 %v1738
    %1812 = vmatprep.subr.bf16.mxu0 0
    %1813 = vmatpush1.bf16.msra.mxu0 %v1737
    %1814 = vmatprep.subr.bf16.mxu0 0
    %1815 = vmatpush1.bf16.msra.mxu0 %v1736
    %1816 = vmatprep.subr.bf16.mxu0 0
    %1817 = vmatpush2.bf16.msra.mxu0 %v1751
    %1818 = vmatprep.subr.bf16.mxu0 0
    %1819 = vmatpush2.bf16.msra.mxu0 %v1750
    %1820 = vmatprep.subr.bf16.mxu0 0
    %1821 = vmatpush2.bf16.msra.mxu0 %v1749
    %1822 = vmatprep.subr.bf16.mxu0 0
    %1823 = vmatpush2.bf16.msra.mxu0 %v1748
    %1824 = vmatprep.subr.bf16.mxu0 0
    %1825 = vmatpush2.bf16.msra.mxu0 %v1747
    %1826 = vmatprep.subr.bf16.mxu0 0
    %1827 = vmatpush2.bf16.msra.mxu0 %v1746
    %1828 = vmatprep.subr.bf16.mxu0 0
    %1829 = vmatpush2.bf16.msra.mxu0 %v1745
    %1830 = vmatprep.subr.bf16.mxu0 0
    %1831 = vmatpush2.bf16.msra.mxu0 %v1744
    %1832 = vmatprep.mubr.bf16.mxu0 %v1534
    %1833 = vmatmul.mubr.bf16.gmra.mxu0 %v1533
    %v1834 = vpop.f32.mrf.mxu0
    %v1835 = vadd.f32 %v1606, %v1834
    %v1836 = vpop.f32.mrf.mxu0
    %v1837 = vpop.f32.mrf.mxu0
    %v1838 = vadd.f32 %v1606, %v1837
    %v1839 = vpop.f32.mrf.mxu0
    %1840 = vdwg.mxu0
    %1841 = vmatprep.subr.bf16.mxu0 0
    %1842 = vmatpush1.bf16.msra.mxu0 %v1759
    %1843 = vmatprep.subr.bf16.mxu0 0
    %1844 = vmatpush1.bf16.msra.mxu0 %v1758
    %1845 = vmatprep.subr.bf16.mxu0 0
    %1846 = vmatpush1.bf16.msra.mxu0 %v1757
    %1847 = vmatprep.subr.bf16.mxu0 0
    %1848 = vmatpush1.bf16.msra.mxu0 %v1756
    %1849 = vmatprep.subr.bf16.mxu0 0
    %1850 = vmatpush1.bf16.msra.mxu0 %v1755
    %1851 = vmatprep.subr.bf16.mxu0 0
    %1852 = vmatpush1.bf16.msra.mxu0 %v1754
    %1853 = vmatprep.subr.bf16.mxu0 0
    %1854 = vmatpush1.bf16.msra.mxu0 %v1753
    %1855 = vmatprep.subr.bf16.mxu0 0
    %1856 = vmatpush1.bf16.msra.mxu0 %v1752
    %1857 = vmatprep.subr.bf16.mxu0 0
    %1858 = vmatpush2.bf16.msra.mxu0 %v1767
    %1859 = vmatprep.subr.bf16.mxu0 0
    %1860 = vmatpush2.bf16.msra.mxu0 %v1766
    %1861 = vmatprep.subr.bf16.mxu0 0
    %1862 = vmatpush2.bf16.msra.mxu0 %v1765
    %1863 = vmatprep.subr.bf16.mxu0 0
    %1864 = vmatpush2.bf16.msra.mxu0 %v1764
    %1865 = vmatprep.subr.bf16.mxu0 0
    %1866 = vmatpush2.bf16.msra.mxu0 %v1763
    %1867 = vmatprep.subr.bf16.mxu0 0
    %1868 = vmatpush2.bf16.msra.mxu0 %v1762
    %1869 = vmatprep.subr.bf16.mxu0 0
    %1870 = vmatpush2.bf16.msra.mxu0 %v1761
    %1871 = vmatprep.subr.bf16.mxu0 0
    %1872 = vmatpush2.bf16.msra.mxu0 %v1760
    %1873 = vmatprep.mubr.bf16.mxu0 %v1536
    %1874 = vmatmul.mubr.bf16.gmra.mxu0 %v1535
    %v1875 = vpop.f32.mrf.mxu0
    %v1876 = vadd.f32 %v1835, %v1875
    %v1877 = vpop.f32.mrf.mxu0
    %v1878 = vpop.f32.mrf.mxu0
    %v1879 = vadd.f32 %v1838, %v1878
    %v1880 = vpop.f32.mrf.mxu0
    %1881 = vdwg.mxu0
    %1882 = vmax.xlane.f32.xlu0 %v1876
    %v1883 = vpop.xlane.xlu0 %1882
    %1884 = vmax.xlane.f32.xlu0 %v1879
    %v1885 = vpop.xlane.xlu0 %1884
    %v1886 = vsub.f32 %v1876, %v1883
    %v1887 = vsub.f32 %v1879, %v1885
    %v1888 = vmul.f32 %v1886, 1.442695
    %v1889 = vpow.pop %v1888
    %v1890 = vmul.f32 %v1887, 1.442695
    %v1891 = vpow.pop %v1890
    %1892 = vadd.xlane.f32.xlu0 %v1889
    %v1893 = vpop.xlane.xlu0 %1892
    %1894 = vadd.xlane.f32.xlu0 %v1891
    %v1895 = vpop.xlane.xlu0 %1894
    %v1896 = vlog2.pop %v1893
    %v1897 = vmul.f32 %v1896, 0.6931472
    %v1898 = vlog2.pop %v1895
    %v1899 = vmul.f32 %v1898, 0.6931472
    %v1900 = vsub.f32 %v1886, %v1897
    %v1901 = vsub.f32 %v1887, %v1899
    %1902 = vst [vmem:[#allocation10] sm:$0xff] %v1900
    %1903 = vst [vmem:[#allocation10 + $0x8] sm:$0xff] %v1901
    // Predicated region
    $region38: #{_classifier_head_impl.1} parent=1 // pred_check
      _
    $region39: #{_classifier_head_impl.1} parent=1 // pred_check_branch
      %1905 = sbr.rel (0) target = $region41
    $region40: #{_classifier_head_impl.1} parent=1 // pred_region
      %s1907 = ssub.s32 256, 128
      %1908 = vsyncadd [#allocation4], %s1907
      %s1909 = sshll.u32 [#allocation10], 4
      %s1910 = int_to_ptr.vmem [resolvable:$true] %s1909
      %1915 = dma.vmem_to_hbm [thread:$0]  %s1910, 128, %s5, [#allocation4], 128, 128, 8
    $region41: #{_classifier_head_impl.1} parent=1 // pred_fallthru
      _
    // Predicated region
    $region42: #{_classifier_head_impl.1} parent=1 // pred_check
      _
    $region43: #{_classifier_head_impl.1} parent=1 // pred_check_branch
      %1917 = sbr.rel (0) target = $region45
    $region44: #{_classifier_head_impl.1} parent=1 // pred_region
      %1918 = dma.done [#allocation4], 256
    $region45: #{_classifier_head_impl.1} parent=1 // pred_fallthru
      _
    %1919 = vsyncpa [#allocation3], 1
    %1920 = vsyncpa [#allocation6], 1
    %1921 = vsyncpa [#allocation9], 1
    %1922 = vsyncpa [#allocation4], 1

</llo_original>
